<compile_context>
chip_gen: v6e
topology: v6e:2x2x1
jax: 0.10.0
libtpu: 0.0.40
codegen_flags: <defaults>
</compile_context>

<pallas_src>
import functools

import jax
import jax.numpy as jnp
from jax.experimental import pallas as pl
from jax.experimental.pallas import tpu as pltpu


def _round_up(n, m):
    return ((n + m - 1) // m) * m


# ----------------------------------------------------------------------------
# Pallas kernel: B-spline evaluation + SiLU residual + scaling/mask + reduction
# ----------------------------------------------------------------------------
def _kan_kernel(x_ref, exp_ref, g_ref, coef_ref, r1_ref, r2_ref,
                sb_ref, ssp_ref, mask_ref, sel_ref,
                yspl_ref, yact_ref, ysum_ref, *, k, nb0, nbasis):
    s_idx = pl.program_id(1)

    # In-kernel fan-out of x onto one lane per spline: xe[:, j] = x[:, j % in_dim]
    # (tiny MXU matmul; avoids materializing x_exp in HBM / tiling DMA by out_dim).
    xe = jnp.dot(x_ref[...], exp_ref[...],
                 preferred_element_type=jnp.float32)          # (TB, TS)

    g = g_ref[...]          # (G_ext, TS)   extended grid, spline index on lanes
    coef = coef_ref[...]    # (nbasis, TS)
    r1 = r1_ref[...]        # (r_rows, TS)  hoisted 1/(g[n+kk]-g[n])
    r2 = r2_ref[...]        # (r_rows, TS)  hoisted 1/(g[n+kk+1]-g[n+1])

    # Cox-de Boor recursion on 2D (TB, TS) slabs (matches kan.spline.B_batch).
    B = [jnp.logical_and(xe >= g[n], xe < g[n + 1]).astype(jnp.float32)
         for n in range(nb0)]
    off = 0
    for kk in range(1, k + 1):
        nb = nb0 - kk
        B = [(xe - g[n]) * r1[off + n] * B[n]
             + (g[n + kk + 1] - xe) * r2[off + n] * B[n + 1]
             for n in range(nb)]
        off += nb
    # len(B) == nbasis == num + k

    # spline(x) = sum_n coef[n] * B_n(x) as an explicit slab accumulation.
    yspl = coef[0] * B[0]
    for n in range(1, nbasis):
        yspl = yspl + coef[n] * B[n]

    # residual b(x) = SiLU(x); sigmoid via EUP tanh (no VPU divide).
    base = xe * (0.5 * jnp.tanh(0.5 * xe) + 0.5)

    y = mask_ref[...] * (sb_ref[...] * base + ssp_ref[...] * yspl)   # (1,TS) bcast

    yspl_ref[...] = yspl
    yact_ref[...] = y

    # sum over in_dim: accumulate (TB, OP) partials across size tiles directly
    # in the resident output block (same block index across the s axis).
    @pl.when(s_idx == 0)
    def _():
        ysum_ref[...] = jnp.zeros_like(ysum_ref)

    ysum_ref[...] += jnp.dot(y, sel_ref[...], preferred_element_type=jnp.float32)


# ----------------------------------------------------------------------------
# Wrapper (glue: grid extension, hoisted reciprocals, padding, tiling)
# ----------------------------------------------------------------------------
def kan_layer_forward(x, grid, coef, scale_base, scale_sp, mask, *, k, in_dim, out_dim):
    batch = x.shape[0]
    size = in_dim * out_dim
    num = grid.shape[1] - 1
    nbasis = num + k
    assert grid.shape[0] == size and coef.shape == (size, nbasis)

    f32 = jnp.float32
    grid = grid.astype(f32)
    coef = coef.astype(f32)

    # --- pad the per-spline ("size") axis to a lane-dense multiple of 128 ----
    SP = _round_up(size, 128)
    OP = _round_up(out_dim, 128)
    if SP > size:
        grid_p = jnp.concatenate(
            [grid, jnp.broadcast_to(grid[:1], (SP - size, num + 1))], axis=0)
        coef_p = jnp.concatenate([coef, jnp.zeros((SP - size, nbasis), f32)], axis=0)
    else:
        grid_p, coef_p = grid, coef

    def pad_vec(v):
        v = v.reshape(size).astype(f32)
        if SP > size:
            v = jnp.concatenate([v, jnp.zeros((SP - size,), f32)])
        return v.reshape(1, SP)

    sb_p, ssp_p, mask_p = pad_vec(scale_base), pad_vec(scale_sp), pad_vec(mask)

    # --- extend grid by k cells each side (kan.spline.extend_grid) -----------
    h = (grid_p[:, -1:] - grid_p[:, :1]) / num
    g = grid_p
    for _ in range(k):
        g = jnp.concatenate([g[:, :1] - h, g, g[:, -1:] + h], axis=1)   # (SP, G_ext)
    G_ext = g.shape[1]
    nb0 = G_ext - 1                      # order-0 bases = num + 2k

    # --- hoist the batch-independent Cox-de Boor denominators ----------------
    if k > 0:
        r1 = jnp.concatenate(
            [1.0 / (g[:, kk:-1] - g[:, :-(kk + 1)]) for kk in range(1, k + 1)], axis=1)
        r2 = jnp.concatenate(
            [1.0 / (g[:, kk + 1:] - g[:, 1:-kk]) for kk in range(1, k + 1)], axis=1)
    else:
        r1 = jnp.zeros((SP, 1), f32)
        r2 = jnp.zeros((SP, 1), f32)
    r_rows = r1.shape[1]

    # transpose parameters so the "size" axis sits on lanes inside the kernel
    g_t, coef_t, r1_t, r2_t = g.T, coef_p.T, r1.T, r2.T

    # --- expansion / reduction one-hot matrices ------------------------------
    col = jnp.arange(SP)
    valid = col < size
    expand = ((col[None, :] % in_dim == jnp.arange(in_dim)[:, None])
              & valid[None, :]).astype(f32)                    # (in_dim, SP)
    sel = ((col[:, None] // in_dim == jnp.arange(OP)[None, :])
           & valid[:, None]).astype(f32)                       # (SP, OP)

    # --- tiling (fits comfortably in scoped VMEM on v5e/v6e/v7x) -------------
    TB = min(128, _round_up(batch, 8))
    batch_p = _round_up(batch, TB)
    x_p = x.astype(f32)
    if batch_p > batch:
        x_p = jnp.concatenate([x_p, jnp.zeros((batch_p - batch, in_dim), f32)], axis=0)

    TS = min(SP, 512)
    while SP % TS:
        TS -= 128

    grid_dims = (batch_p // TB, SP // TS)

    kernel = functools.partial(_kan_kernel, k=k, nb0=nb0, nbasis=nbasis)

    yspl, yact, ysum = pl.pallas_call(
        kernel,
        out_shape=(
            jax.ShapeDtypeStruct((batch_p, SP), f32),
            jax.ShapeDtypeStruct((batch_p, SP), f32),
            jax.ShapeDtypeStruct((batch_p, OP), f32),
        ),
        grid_spec=pltpu.PrefetchScalarGridSpec(
            num_scalar_prefetch=0,
            grid=grid_dims,
            in_specs=[
                pl.BlockSpec((TB, in_dim), lambda b, s: (b, 0)),    # x
                pl.BlockSpec((in_dim, TS), lambda b, s: (0, s)),    # expand
                pl.BlockSpec((G_ext, TS), lambda b, s: (0, s)),     # extended grid
                pl.BlockSpec((nbasis, TS), lambda b, s: (0, s)),    # coef
                pl.BlockSpec((r_rows, TS), lambda b, s: (0, s)),    # recips (left)
                pl.BlockSpec((r_rows, TS), lambda b, s: (0, s)),    # recips (right)
                pl.BlockSpec((1, TS), lambda b, s: (0, s)),         # scale_base
                pl.BlockSpec((1, TS), lambda b, s: (0, s)),         # scale_sp
                pl.BlockSpec((1, TS), lambda b, s: (0, s)),         # mask
                pl.BlockSpec((TS, OP), lambda b, s: (s, 0)),        # sel
            ],
            out_specs=(
                pl.BlockSpec((TB, TS), lambda b, s: (b, s)),        # postspline
                pl.BlockSpec((TB, TS), lambda b, s: (b, s)),        # postacts
                pl.BlockSpec((TB, OP), lambda b, s: (b, 0)),        # y (reduced)
            ),
        ),
        compiler_params=pltpu.CompilerParams(
            dimension_semantics=("parallel", "arbitrary"),
            vmem_limit_bytes=32 * 1024 * 1024),
    )(x_p, expand, g_t, coef_t, r1_t, r2_t, sb_p, ssp_p, mask_p, sel)

    # --- glue back to the PyTorch output shapes ------------------------------
    yspl = yspl[:batch, :size]
    yact = yact[:batch, :size]
    y = ysum[:batch, :out_dim]
    preacts = jnp.broadcast_to(x.astype(f32)[:, None, :], (batch, out_dim, in_dim))
    postspline = yspl.reshape(batch, out_dim, in_dim)
    postacts = yact.reshape(batch, out_dim, in_dim)
    return y, preacts, postacts, postspline


# ----------------------------------------------------------------------------
# Pure-JAX reference (mirrors kan.spline) — used for parameter init + check
# ----------------------------------------------------------------------------
def _b_batch_ref(x, grid, k):
    # x: (size, batch), grid: (size, num+1)  -> (size, num+k, batch)
    h = (grid[:, -1:] - grid[:, :1]) / (grid.shape[1] - 1)
    g = grid
    for _ in range(k):
        g = jnp.concatenate([g[:, :1] - h, g, g[:, -1:] + h], axis=1)
    xb = x[:, None, :]
    gb = g[:, :, None]
    B = jnp.logical_and(xb >= gb[:, :-1], xb < gb[:, 1:]).astype(x.dtype)
    for kk in range(1, k + 1):
        B = ((xb - gb[:, :-(kk + 1)]) / (gb[:, kk:-1] - gb[:, :-(kk + 1)]) * B[:, :-1]
             + (gb[:, kk + 1:] - xb) / (gb[:, kk + 1:] - gb[:, 1:-kk]) * B[:, 1:])
    return B


def _kan_forward_ref(x, grid, coef, scale_base, scale_sp, mask, *, k, in_dim, out_dim):
    batch = x.shape[0]
    xe = jnp.tile(x, (1, out_dim)).T                         # (size, batch)
    preacts = xe.T.reshape(batch, out_dim, in_dim)
    base = (xe * jax.nn.sigmoid(xe)).T                       # SiLU, (batch, size)
    B = _b_batch_ref(xe, grid, k)
    yspl = jnp.einsum('ij,ijk->ik', coef, B).T               # (batch, size)
    postspline = yspl.reshape(batch, out_dim, in_dim)
    y = scale_base[None, :] * base + scale_sp[None, :] * yspl
    y = mask[None, :] * y
    postacts = y.reshape(batch, out_dim, in_dim)
    return postacts.sum(2), preacts, postacts, postspline


def init_kan_params(key, *, in_dim, out_dim, num, k,
                    noise_scale=0.1, scale_base=1.0, scale_sp=1.0,
                    grid_range=(-1.0, 1.0)):
    size = in_dim * out_dim
    grid = jnp.broadcast_to(
        jnp.linspace(grid_range[0], grid_range[1], num + 1, dtype=jnp.float32),
        (size, num + 1))
    noises = (jax.random.uniform(key, (size, num + 1), dtype=jnp.float32) - 0.5) \
             * noise_scale / num
    # coef = curve2coef(grid, noises, grid, k): least-squares fit (init-only,
    # host-side glue) — solved via ridge-regularized normal equations to keep
    # the init light on TPU.
    mat = jnp.transpose(_b_batch_ref(grid, grid, k), (0, 2, 1))  # (size, num+1, num+k)
    ata = jnp.einsum('sij,sik->sjk', mat, mat) \
        + 1e-6 * jnp.eye(num + k, dtype=jnp.float32)[None]
    atb = jnp.einsum('sij,si->sj', mat, noises)
    coef = jnp.linalg.solve(ata, atb[..., None])[..., 0]          # (size, num+k)
    sb = jnp.full((size,), scale_base, dtype=jnp.float32)
    ssp = jnp.full((size,), scale_sp, dtype=jnp.float32)
    mask = jnp.ones((size,), dtype=jnp.float32)
    return grid, coef.astype(jnp.float32), sb, ssp, mask


if __name__ == "__main__":
    in_dim, out_dim, num, k = 4, 8, 5, 3
    batch = 16

    key = jax.random.PRNGKey(0)
    k_noise, k_x = jax.random.split(key)
    grid, coef, sb, ssp, mask = init_kan_params(
        k_noise, in_dim=in_dim, out_dim=out_dim, num=num, k=k)
    x = jax.random.normal(k_x, (batch, in_dim), dtype=jnp.float32)

    y, preacts, postacts, postspline = jax.block_until_ready(
        kan_layer_forward(x, grid, coef, sb, ssp, mask,
                          k=k, in_dim=in_dim, out_dim=out_dim))

    # shape checks (match the PyTorch forward)
    assert y.shape == (batch, out_dim)
    assert preacts.shape == (batch, out_dim, in_dim)
    assert postacts.shape == (batch, out_dim, in_dim)
    assert postspline.shape == (batch, out_dim, in_dim)

    # numerical check against the pure-JAX reference
    y_r, pre_r, post_r, spl_r = _kan_forward_ref(
        x, grid, coef, sb, ssp, mask, k=k, in_dim=in_dim, out_dim=out_dim)
    for a, b in ((y, y_r), (preacts, pre_r), (postacts, post_r), (postspline, spl_r)):
        assert jnp.allclose(a, b, atol=1e-4, rtol=1e-4), "mismatch vs reference"

    # TODO(synk): update_grid_from_samples / initialize_grid_from_parent /
    # get_subset / lock / unlock are host-side parameter-management utilities,
    # not part of the forward pass kernel.
    print("KERNEL_OK")
</pallas_src>

<mosaic_0001>
module attributes {stable_mosaic.version = 11 : i64} {
  func.func @_kan_kernel(%arg0: i32, %arg1: i32, %arg2: memref<16x4xf32, #tpu.memory_space<vmem>>, %arg3: memref<4x128xf32, #tpu.memory_space<vmem>>, %arg4: memref<12x128xf32, #tpu.memory_space<vmem>>, %arg5: memref<8x128xf32, #tpu.memory_space<vmem>>, %arg6: memref<27x128xf32, #tpu.memory_space<vmem>>, %arg7: memref<27x128xf32, #tpu.memory_space<vmem>>, %arg8: memref<1x128xf32, #tpu.memory_space<vmem>>, %arg9: memref<1x128xf32, #tpu.memory_space<vmem>>, %arg10: memref<1x128xf32, #tpu.memory_space<vmem>>, %arg11: memref<128x128xf32, #tpu.memory_space<vmem>>, %arg12: memref<16x128xf32, #tpu.memory_space<vmem>>, %arg13: memref<16x128xf32, #tpu.memory_space<vmem>>, %arg14: memref<16x128xf32, #tpu.memory_space<vmem>>) attributes {dimension_semantics = [#tpu.dimension_semantics<parallel>, #tpu.dimension_semantics<arbitrary>], iteration_bounds = array<i64: 1, 1>, scalar_prefetch = 0 : i64, scratch_operands = 0 : i64, tpu.core_type = #tpu.core_type<tc>, window_params = [{transform_indices = @transform_0, window_bounds = array<i64: 16, 4>}, {transform_indices = @transform_1, window_bounds = array<i64: 4, 128>}, {transform_indices = @transform_2, window_bounds = array<i64: 12, 128>}, {transform_indices = @transform_3, window_bounds = array<i64: 8, 128>}, {transform_indices = @transform_4, window_bounds = array<i64: 27, 128>}, {transform_indices = @transform_5, window_bounds = array<i64: 27, 128>}, {transform_indices = @transform_6, window_bounds = array<i64: 1, 128>}, {transform_indices = @transform_7, window_bounds = array<i64: 1, 128>}, {transform_indices = @transform_8, window_bounds = array<i64: 1, 128>}, {transform_indices = @transform_9, window_bounds = array<i64: 128, 128>}, {transform_indices = @transform_10, window_bounds = array<i64: 16, 128>}, {transform_indices = @transform_11, window_bounds = array<i64: 16, 128>}, {transform_indices = @transform_12, window_bounds = array<i64: 16, 128>}]} {
    %c0 = arith.constant 0 : index
    %c0_0 = arith.constant 0 : index
    %0 = vector.load %arg2[%c0, %c0_0] : memref<16x4xf32, #tpu.memory_space<vmem>>, vector<16x4xf32>
    %c0_1 = arith.constant 0 : index
    %c0_2 = arith.constant 0 : index
    %1 = vector.load %arg3[%c0_1, %c0_2] : memref<4x128xf32, #tpu.memory_space<vmem>>, vector<4x128xf32>
    %cst = arith.constant dense<0.000000e+00> : vector<16x128xf32>
    %2 = tpu.matmul %0, %1, %cst {dimension_numbers = #tpu.dot_dimension_numbers<[1], [0], [0], [1], [0, 0, 1, 1], [], []>} : vector<16x4xf32>, vector<4x128xf32>, vector<16x128xf32> -> vector<16x128xf32>
    %c0_3 = arith.constant 0 : index
    %c0_4 = arith.constant 0 : index
    %3 = vector.load %arg4[%c0_3, %c0_4] : memref<12x128xf32, #tpu.memory_space<vmem>>, vector<12x128xf32>
    %c0_5 = arith.constant 0 : index
    %c0_6 = arith.constant 0 : index
    %4 = vector.load %arg5[%c0_5, %c0_6] : memref<8x128xf32, #tpu.memory_space<vmem>>, vector<8x128xf32>
    %c0_7 = arith.constant 0 : index
    %c0_8 = arith.constant 0 : index
    %5 = vector.load %arg6[%c0_7, %c0_8] : memref<27x128xf32, #tpu.memory_space<vmem>>, vector<27x128xf32>
    %c0_9 = arith.constant 0 : index
    %c0_10 = arith.constant 0 : index
    %6 = vector.load %arg7[%c0_9, %c0_10] : memref<27x128xf32, #tpu.memory_space<vmem>>, vector<27x128xf32>
    %7 = vector.extract_strided_slice %3 {offsets = [0, 0], sizes = [1, 128], strides = [1, 1]} : vector<12x128xf32> to vector<1x128xf32>
    %8 = vector.shape_cast %7 : vector<1x128xf32> to vector<128xf32>
    %9 = vector.shape_cast %8 : vector<128xf32> to vector<1x128xf32>
    %10 = vector.broadcast %9 : vector<1x128xf32> to vector<16x128xf32>
    %11 = arith.cmpf oge, %2, %10 : vector<16x128xf32>
    %12 = vector.extract_strided_slice %3 {offsets = [1, 0], sizes = [1, 128], strides = [1, 1]} : vector<12x128xf32> to vector<1x128xf32>
    %13 = vector.shape_cast %12 : vector<1x128xf32> to vector<128xf32>
    %14 = vector.shape_cast %13 : vector<128xf32> to vector<1x128xf32>
    %15 = vector.broadcast %14 : vector<1x128xf32> to vector<16x128xf32>
    %16 = arith.cmpf olt, %2, %15 : vector<16x128xf32>
    %17 = arith.andi %11, %16 : vector<16x128xi1>
    %18 = arith.extui %17 : vector<16x128xi1> to vector<16x128xi32>
    %19 = arith.sitofp %18 : vector<16x128xi32> to vector<16x128xf32>
    %20 = vector.extract_strided_slice %3 {offsets = [1, 0], sizes = [1, 128], strides = [1, 1]} : vector<12x128xf32> to vector<1x128xf32>
    %21 = vector.shape_cast %20 : vector<1x128xf32> to vector<128xf32>
    %22 = vector.shape_cast %21 : vector<128xf32> to vector<1x128xf32>
    %23 = vector.broadcast %22 : vector<1x128xf32> to vector<16x128xf32>
    %24 = arith.cmpf oge, %2, %23 : vector<16x128xf32>
    %25 = vector.extract_strided_slice %3 {offsets = [2, 0], sizes = [1, 128], strides = [1, 1]} : vector<12x128xf32> to vector<1x128xf32>
    %26 = vector.shape_cast %25 : vector<1x128xf32> to vector<128xf32>
    %27 = vector.shape_cast %26 : vector<128xf32> to vector<1x128xf32>
    %28 = vector.broadcast %27 : vector<1x128xf32> to vector<16x128xf32>
    %29 = arith.cmpf olt, %2, %28 : vector<16x128xf32>
    %30 = arith.andi %24, %29 : vector<16x128xi1>
    %31 = arith.extui %30 : vector<16x128xi1> to vector<16x128xi32>
    %32 = arith.sitofp %31 : vector<16x128xi32> to vector<16x128xf32>
    %33 = vector.extract_strided_slice %3 {offsets = [2, 0], sizes = [1, 128], strides = [1, 1]} : vector<12x128xf32> to vector<1x128xf32>
    %34 = vector.shape_cast %33 : vector<1x128xf32> to vector<128xf32>
    %35 = vector.shape_cast %34 : vector<128xf32> to vector<1x128xf32>
    %36 = vector.broadcast %35 : vector<1x128xf32> to vector<16x128xf32>
    %37 = arith.cmpf oge, %2, %36 : vector<16x128xf32>
    %38 = vector.extract_strided_slice %3 {offsets = [3, 0], sizes = [1, 128], strides = [1, 1]} : vector<12x128xf32> to vector<1x128xf32>
    %39 = vector.shape_cast %38 : vector<1x128xf32> to vector<128xf32>
    %40 = vector.shape_cast %39 : vector<128xf32> to vector<1x128xf32>
    %41 = vector.broadcast %40 : vector<1x128xf32> to vector<16x128xf32>
    %42 = arith.cmpf olt, %2, %41 : vector<16x128xf32>
    %43 = arith.andi %37, %42 : vector<16x128xi1>
    %44 = arith.extui %43 : vector<16x128xi1> to vector<16x128xi32>
    %45 = arith.sitofp %44 : vector<16x128xi32> to vector<16x128xf32>
    %46 = vector.extract_strided_slice %3 {offsets = [3, 0], sizes = [1, 128], strides = [1, 1]} : vector<12x128xf32> to vector<1x128xf32>
    %47 = vector.shape_cast %46 : vector<1x128xf32> to vector<128xf32>
    %48 = vector.shape_cast %47 : vector<128xf32> to vector<1x128xf32>
    %49 = vector.broadcast %48 : vector<1x128xf32> to vector<16x128xf32>
    %50 = arith.cmpf oge, %2, %49 : vector<16x128xf32>
    %51 = vector.extract_strided_slice %3 {offsets = [4, 0], sizes = [1, 128], strides = [1, 1]} : vector<12x128xf32> to vector<1x128xf32>
    %52 = vector.shape_cast %51 : vector<1x128xf32> to vector<128xf32>
    %53 = vector.shape_cast %52 : vector<128xf32> to vector<1x128xf32>
    %54 = vector.broadcast %53 : vector<1x128xf32> to vector<16x128xf32>
    %55 = arith.cmpf olt, %2, %54 : vector<16x128xf32>
    %56 = arith.andi %50, %55 : vector<16x128xi1>
    %57 = arith.extui %56 : vector<16x128xi1> to vector<16x128xi32>
    %58 = arith.sitofp %57 : vector<16x128xi32> to vector<16x128xf32>
    %59 = vector.extract_strided_slice %3 {offsets = [4, 0], sizes = [1, 128], strides = [1, 1]} : vector<12x128xf32> to vector<1x128xf32>
    %60 = vector.shape_cast %59 : vector<1x128xf32> to vector<128xf32>
    %61 = vector.shape_cast %60 : vector<128xf32> to vector<1x128xf32>
    %62 = vector.broadcast %61 : vector<1x128xf32> to vector<16x128xf32>
    %63 = arith.cmpf oge, %2, %62 : vector<16x128xf32>
    %64 = vector.extract_strided_slice %3 {offsets = [5, 0], sizes = [1, 128], strides = [1, 1]} : vector<12x128xf32> to vector<1x128xf32>
    %65 = vector.shape_cast %64 : vector<1x128xf32> to vector<128xf32>
    %66 = vector.shape_cast %65 : vector<128xf32> to vector<1x128xf32>
    %67 = vector.broadcast %66 : vector<1x128xf32> to vector<16x128xf32>
    %68 = arith.cmpf olt, %2, %67 : vector<16x128xf32>
    %69 = arith.andi %63, %68 : vector<16x128xi1>
    %70 = arith.extui %69 : vector<16x128xi1> to vector<16x128xi32>
    %71 = arith.sitofp %70 : vector<16x128xi32> to vector<16x128xf32>
    %72 = vector.extract_strided_slice %3 {offsets = [5, 0], sizes = [1, 128], strides = [1, 1]} : vector<12x128xf32> to vector<1x128xf32>
    %73 = vector.shape_cast %72 : vector<1x128xf32> to vector<128xf32>
    %74 = vector.shape_cast %73 : vector<128xf32> to vector<1x128xf32>
    %75 = vector.broadcast %74 : vector<1x128xf32> to vector<16x128xf32>
    %76 = arith.cmpf oge, %2, %75 : vector<16x128xf32>
    %77 = vector.extract_strided_slice %3 {offsets = [6, 0], sizes = [1, 128], strides = [1, 1]} : vector<12x128xf32> to vector<1x128xf32>
    %78 = vector.shape_cast %77 : vector<1x128xf32> to vector<128xf32>
    %79 = vector.shape_cast %78 : vector<128xf32> to vector<1x128xf32>
    %80 = vector.broadcast %79 : vector<1x128xf32> to vector<16x128xf32>
    %81 = arith.cmpf olt, %2, %80 : vector<16x128xf32>
    %82 = arith.andi %76, %81 : vector<16x128xi1>
    %83 = arith.extui %82 : vector<16x128xi1> to vector<16x128xi32>
    %84 = arith.sitofp %83 : vector<16x128xi32> to vector<16x128xf32>
    %85 = vector.extract_strided_slice %3 {offsets = [6, 0], sizes = [1, 128], strides = [1, 1]} : vector<12x128xf32> to vector<1x128xf32>
    %86 = vector.shape_cast %85 : vector<1x128xf32> to vector<128xf32>
    %87 = vector.shape_cast %86 : vector<128xf32> to vector<1x128xf32>
    %88 = vector.broadcast %87 : vector<1x128xf32> to vector<16x128xf32>
    %89 = arith.cmpf oge, %2, %88 : vector<16x128xf32>
    %90 = vector.extract_strided_slice %3 {offsets = [7, 0], sizes = [1, 128], strides = [1, 1]} : vector<12x128xf32> to vector<1x128xf32>
    %91 = vector.shape_cast %90 : vector<1x128xf32> to vector<128xf32>
    %92 = vector.shape_cast %91 : vector<128xf32> to vector<1x128xf32>
    %93 = vector.broadcast %92 : vector<1x128xf32> to vector<16x128xf32>
    %94 = arith.cmpf olt, %2, %93 : vector<16x128xf32>
    %95 = arith.andi %89, %94 : vector<16x128xi1>
    %96 = arith.extui %95 : vector<16x128xi1> to vector<16x128xi32>
    %97 = arith.sitofp %96 : vector<16x128xi32> to vector<16x128xf32>
    %98 = vector.extract_strided_slice %3 {offsets = [7, 0], sizes = [1, 128], strides = [1, 1]} : vector<12x128xf32> to vector<1x128xf32>
    %99 = vector.shape_cast %98 : vector<1x128xf32> to vector<128xf32>
    %100 = vector.shape_cast %99 : vector<128xf32> to vector<1x128xf32>
    %101 = vector.broadcast %100 : vector<1x128xf32> to vector<16x128xf32>
    %102 = arith.cmpf oge, %2, %101 : vector<16x128xf32>
    %103 = vector.extract_strided_slice %3 {offsets = [8, 0], sizes = [1, 128], strides = [1, 1]} : vector<12x128xf32> to vector<1x128xf32>
    %104 = vector.shape_cast %103 : vector<1x128xf32> to vector<128xf32>
    %105 = vector.shape_cast %104 : vector<128xf32> to vector<1x128xf32>
    %106 = vector.broadcast %105 : vector<1x128xf32> to vector<16x128xf32>
    %107 = arith.cmpf olt, %2, %106 : vector<16x128xf32>
    %108 = arith.andi %102, %107 : vector<16x128xi1>
    %109 = arith.extui %108 : vector<16x128xi1> to vector<16x128xi32>
    %110 = arith.sitofp %109 : vector<16x128xi32> to vector<16x128xf32>
    %111 = vector.extract_strided_slice %3 {offsets = [8, 0], sizes = [1, 128], strides = [1, 1]} : vector<12x128xf32> to vector<1x128xf32>
    %112 = vector.shape_cast %111 : vector<1x128xf32> to vector<128xf32>
    %113 = vector.shape_cast %112 : vector<128xf32> to vector<1x128xf32>
    %114 = vector.broadcast %113 : vector<1x128xf32> to vector<16x128xf32>
    %115 = arith.cmpf oge, %2, %114 : vector<16x128xf32>
    %116 = vector.extract_strided_slice %3 {offsets = [9, 0], sizes = [1, 128], strides = [1, 1]} : vector<12x128xf32> to vector<1x128xf32>
    %117 = vector.shape_cast %116 : vector<1x128xf32> to vector<128xf32>
    %118 = vector.shape_cast %117 : vector<128xf32> to vector<1x128xf32>
    %119 = vector.broadcast %118 : vector<1x128xf32> to vector<16x128xf32>
    %120 = arith.cmpf olt, %2, %119 : vector<16x128xf32>
    %121 = arith.andi %115, %120 : vector<16x128xi1>
    %122 = arith.extui %121 : vector<16x128xi1> to vector<16x128xi32>
    %123 = arith.sitofp %122 : vector<16x128xi32> to vector<16x128xf32>
    %124 = vector.extract_strided_slice %3 {offsets = [9, 0], sizes = [1, 128], strides = [1, 1]} : vector<12x128xf32> to vector<1x128xf32>
    %125 = vector.shape_cast %124 : vector<1x128xf32> to vector<128xf32>
    %126 = vector.shape_cast %125 : vector<128xf32> to vector<1x128xf32>
    %127 = vector.broadcast %126 : vector<1x128xf32> to vector<16x128xf32>
    %128 = arith.cmpf oge, %2, %127 : vector<16x128xf32>
    %129 = vector.extract_strided_slice %3 {offsets = [10, 0], sizes = [1, 128], strides = [1, 1]} : vector<12x128xf32> to vector<1x128xf32>
    %130 = vector.shape_cast %129 : vector<1x128xf32> to vector<128xf32>
    %131 = vector.shape_cast %130 : vector<128xf32> to vector<1x128xf32>
    %132 = vector.broadcast %131 : vector<1x128xf32> to vector<16x128xf32>
    %133 = arith.cmpf olt, %2, %132 : vector<16x128xf32>
    %134 = arith.andi %128, %133 : vector<16x128xi1>
    %135 = arith.extui %134 : vector<16x128xi1> to vector<16x128xi32>
    %136 = arith.sitofp %135 : vector<16x128xi32> to vector<16x128xf32>
    %137 = vector.extract_strided_slice %3 {offsets = [10, 0], sizes = [1, 128], strides = [1, 1]} : vector<12x128xf32> to vector<1x128xf32>
    %138 = vector.shape_cast %137 : vector<1x128xf32> to vector<128xf32>
    %139 = vector.shape_cast %138 : vector<128xf32> to vector<1x128xf32>
    %140 = vector.broadcast %139 : vector<1x128xf32> to vector<16x128xf32>
    %141 = arith.cmpf oge, %2, %140 : vector<16x128xf32>
    %142 = vector.extract_strided_slice %3 {offsets = [11, 0], sizes = [1, 128], strides = [1, 1]} : vector<12x128xf32> to vector<1x128xf32>
    %143 = vector.shape_cast %142 : vector<1x128xf32> to vector<128xf32>
    %144 = vector.shape_cast %143 : vector<128xf32> to vector<1x128xf32>
    %145 = vector.broadcast %144 : vector<1x128xf32> to vector<16x128xf32>
    %146 = arith.cmpf olt, %2, %145 : vector<16x128xf32>
    %147 = arith.andi %141, %146 : vector<16x128xi1>
    %148 = arith.extui %147 : vector<16x128xi1> to vector<16x128xi32>
    %149 = arith.sitofp %148 : vector<16x128xi32> to vector<16x128xf32>
    %150 = vector.extract_strided_slice %3 {offsets = [0, 0], sizes = [1, 128], strides = [1, 1]} : vector<12x128xf32> to vector<1x128xf32>
    %151 = vector.shape_cast %150 : vector<1x128xf32> to vector<128xf32>
    %152 = vector.shape_cast %151 : vector<128xf32> to vector<1x128xf32>
    %153 = vector.broadcast %152 : vector<1x128xf32> to vector<16x128xf32>
    %154 = arith.subf %2, %153 : vector<16x128xf32>
    %155 = vector.extract_strided_slice %5 {offsets = [0, 0], sizes = [1, 128], strides = [1, 1]} : vector<27x128xf32> to vector<1x128xf32>
    %156 = vector.shape_cast %155 : vector<1x128xf32> to vector<128xf32>
    %157 = vector.shape_cast %156 : vector<128xf32> to vector<1x128xf32>
    %158 = vector.broadcast %157 : vector<1x128xf32> to vector<16x128xf32>
    %159 = arith.mulf %154, %158 : vector<16x128xf32>
    %160 = arith.mulf %159, %19 : vector<16x128xf32>
    %161 = vector.extract_strided_slice %3 {offsets = [2, 0], sizes = [1, 128], strides = [1, 1]} : vector<12x128xf32> to vector<1x128xf32>
    %162 = vector.shape_cast %161 : vector<1x128xf32> to vector<128xf32>
    %163 = vector.shape_cast %162 : vector<128xf32> to vector<1x128xf32>
    %164 = vector.broadcast %163 : vector<1x128xf32> to vector<16x128xf32>
    %165 = arith.subf %164, %2 : vector<16x128xf32>
    %166 = vector.extract_strided_slice %6 {offsets = [0, 0], sizes = [1, 128], strides = [1, 1]} : vector<27x128xf32> to vector<1x128xf32>
    %167 = vector.shape_cast %166 : vector<1x128xf32> to vector<128xf32>
    %168 = vector.shape_cast %167 : vector<128xf32> to vector<1x128xf32>
    %169 = vector.broadcast %168 : vector<1x128xf32> to vector<16x128xf32>
    %170 = arith.mulf %165, %169 : vector<16x128xf32>
    %171 = arith.mulf %170, %32 : vector<16x128xf32>
    %172 = arith.addf %160, %171 : vector<16x128xf32>
    %173 = vector.extract_strided_slice %3 {offsets = [1, 0], sizes = [1, 128], strides = [1, 1]} : vector<12x128xf32> to vector<1x128xf32>
    %174 = vector.shape_cast %173 : vector<1x128xf32> to vector<128xf32>
    %175 = vector.shape_cast %174 : vector<128xf32> to vector<1x128xf32>
    %176 = vector.broadcast %175 : vector<1x128xf32> to vector<16x128xf32>
    %177 = arith.subf %2, %176 : vector<16x128xf32>
    %178 = vector.extract_strided_slice %5 {offsets = [1, 0], sizes = [1, 128], strides = [1, 1]} : vector<27x128xf32> to vector<1x128xf32>
    %179 = vector.shape_cast %178 : vector<1x128xf32> to vector<128xf32>
    %180 = vector.shape_cast %179 : vector<128xf32> to vector<1x128xf32>
    %181 = vector.broadcast %180 : vector<1x128xf32> to vector<16x128xf32>
    %182 = arith.mulf %177, %181 : vector<16x128xf32>
    %183 = arith.mulf %182, %32 : vector<16x128xf32>
    %184 = vector.extract_strided_slice %3 {offsets = [3, 0], sizes = [1, 128], strides = [1, 1]} : vector<12x128xf32> to vector<1x128xf32>
    %185 = vector.shape_cast %184 : vector<1x128xf32> to vector<128xf32>
    %186 = vector.shape_cast %185 : vector<128xf32> to vector<1x128xf32>
    %187 = vector.broadcast %186 : vector<1x128xf32> to vector<16x128xf32>
    %188 = arith.subf %187, %2 : vector<16x128xf32>
    %189 = vector.extract_strided_slice %6 {offsets = [1, 0], sizes = [1, 128], strides = [1, 1]} : vector<27x128xf32> to vector<1x128xf32>
    %190 = vector.shape_cast %189 : vector<1x128xf32> to vector<128xf32>
    %191 = vector.shape_cast %190 : vector<128xf32> to vector<1x128xf32>
    %192 = vector.broadcast %191 : vector<1x128xf32> to vector<16x128xf32>
    %193 = arith.mulf %188, %192 : vector<16x128xf32>
    %194 = arith.mulf %193, %45 : vector<16x128xf32>
    %195 = arith.addf %183, %194 : vector<16x128xf32>
    %196 = vector.extract_strided_slice %3 {offsets = [2, 0], sizes = [1, 128], strides = [1, 1]} : vector<12x128xf32> to vector<1x128xf32>
    %197 = vector.shape_cast %196 : vector<1x128xf32> to vector<128xf32>
    %198 = vector.shape_cast %197 : vector<128xf32> to vector<1x128xf32>
    %199 = vector.broadcast %198 : vector<1x128xf32> to vector<16x128xf32>
    %200 = arith.subf %2, %199 : vector<16x128xf32>
    %201 = vector.extract_strided_slice %5 {offsets = [2, 0], sizes = [1, 128], strides = [1, 1]} : vector<27x128xf32> to vector<1x128xf32>
    %202 = vector.shape_cast %201 : vector<1x128xf32> to vector<128xf32>
    %203 = vector.shape_cast %202 : vector<128xf32> to vector<1x128xf32>
    %204 = vector.broadcast %203 : vector<1x128xf32> to vector<16x128xf32>
    %205 = arith.mulf %200, %204 : vector<16x128xf32>
    %206 = arith.mulf %205, %45 : vector<16x128xf32>
    %207 = vector.extract_strided_slice %3 {offsets = [4, 0], sizes = [1, 128], strides = [1, 1]} : vector<12x128xf32> to vector<1x128xf32>
    %208 = vector.shape_cast %207 : vector<1x128xf32> to vector<128xf32>
    %209 = vector.shape_cast %208 : vector<128xf32> to vector<1x128xf32>
    %210 = vector.broadcast %209 : vector<1x128xf32> to vector<16x128xf32>
    %211 = arith.subf %210, %2 : vector<16x128xf32>
    %212 = vector.extract_strided_slice %6 {offsets = [2, 0], sizes = [1, 128], strides = [1, 1]} : vector<27x128xf32> to vector<1x128xf32>
    %213 = vector.shape_cast %212 : vector<1x128xf32> to vector<128xf32>
    %214 = vector.shape_cast %213 : vector<128xf32> to vector<1x128xf32>
    %215 = vector.broadcast %214 : vector<1x128xf32> to vector<16x128xf32>
    %216 = arith.mulf %211, %215 : vector<16x128xf32>
    %217 = arith.mulf %216, %58 : vector<16x128xf32>
    %218 = arith.addf %206, %217 : vector<16x128xf32>
    %219 = vector.extract_strided_slice %3 {offsets = [3, 0], sizes = [1, 128], strides = [1, 1]} : vector<12x128xf32> to vector<1x128xf32>
    %220 = vector.shape_cast %219 : vector<1x128xf32> to vector<128xf32>
    %221 = vector.shape_cast %220 : vector<128xf32> to vector<1x128xf32>
    %222 = vector.broadcast %221 : vector<1x128xf32> to vector<16x128xf32>
    %223 = arith.subf %2, %222 : vector<16x128xf32>
    %224 = vector.extract_strided_slice %5 {offsets = [3, 0], sizes = [1, 128], strides = [1, 1]} : vector<27x128xf32> to vector<1x128xf32>
    %225 = vector.shape_cast %224 : vector<1x128xf32> to vector<128xf32>
    %226 = vector.shape_cast %225 : vector<128xf32> to vector<1x128xf32>
    %227 = vector.broadcast %226 : vector<1x128xf32> to vector<16x128xf32>
    %228 = arith.mulf %223, %227 : vector<16x128xf32>
    %229 = arith.mulf %228, %58 : vector<16x128xf32>
    %230 = vector.extract_strided_slice %3 {offsets = [5, 0], sizes = [1, 128], strides = [1, 1]} : vector<12x128xf32> to vector<1x128xf32>
    %231 = vector.shape_cast %230 : vector<1x128xf32> to vector<128xf32>
    %232 = vector.shape_cast %231 : vector<128xf32> to vector<1x128xf32>
    %233 = vector.broadcast %232 : vector<1x128xf32> to vector<16x128xf32>
    %234 = arith.subf %233, %2 : vector<16x128xf32>
    %235 = vector.extract_strided_slice %6 {offsets = [3, 0], sizes = [1, 128], strides = [1, 1]} : vector<27x128xf32> to vector<1x128xf32>
    %236 = vector.shape_cast %235 : vector<1x128xf32> to vector<128xf32>
    %237 = vector.shape_cast %236 : vector<128xf32> to vector<1x128xf32>
    %238 = vector.broadcast %237 : vector<1x128xf32> to vector<16x128xf32>
    %239 = arith.mulf %234, %238 : vector<16x128xf32>
    %240 = arith.mulf %239, %71 : vector<16x128xf32>
    %241 = arith.addf %229, %240 : vector<16x128xf32>
    %242 = vector.extract_strided_slice %3 {offsets = [4, 0], sizes = [1, 128], strides = [1, 1]} : vector<12x128xf32> to vector<1x128xf32>
    %243 = vector.shape_cast %242 : vector<1x128xf32> to vector<128xf32>
    %244 = vector.shape_cast %243 : vector<128xf32> to vector<1x128xf32>
    %245 = vector.broadcast %244 : vector<1x128xf32> to vector<16x128xf32>
    %246 = arith.subf %2, %245 : vector<16x128xf32>
    %247 = vector.extract_strided_slice %5 {offsets = [4, 0], sizes = [1, 128], strides = [1, 1]} : vector<27x128xf32> to vector<1x128xf32>
    %248 = vector.shape_cast %247 : vector<1x128xf32> to vector<128xf32>
    %249 = vector.shape_cast %248 : vector<128xf32> to vector<1x128xf32>
    %250 = vector.broadcast %249 : vector<1x128xf32> to vector<16x128xf32>
    %251 = arith.mulf %246, %250 : vector<16x128xf32>
    %252 = arith.mulf %251, %71 : vector<16x128xf32>
    %253 = vector.extract_strided_slice %3 {offsets = [6, 0], sizes = [1, 128], strides = [1, 1]} : vector<12x128xf32> to vector<1x128xf32>
    %254 = vector.shape_cast %253 : vector<1x128xf32> to vector<128xf32>
    %255 = vector.shape_cast %254 : vector<128xf32> to vector<1x128xf32>
    %256 = vector.broadcast %255 : vector<1x128xf32> to vector<16x128xf32>
    %257 = arith.subf %256, %2 : vector<16x128xf32>
    %258 = vector.extract_strided_slice %6 {offsets = [4, 0], sizes = [1, 128], strides = [1, 1]} : vector<27x128xf32> to vector<1x128xf32>
    %259 = vector.shape_cast %258 : vector<1x128xf32> to vector<128xf32>
    %260 = vector.shape_cast %259 : vector<128xf32> to vector<1x128xf32>
    %261 = vector.broadcast %260 : vector<1x128xf32> to vector<16x128xf32>
    %262 = arith.mulf %257, %261 : vector<16x128xf32>
    %263 = arith.mulf %262, %84 : vector<16x128xf32>
    %264 = arith.addf %252, %263 : vector<16x128xf32>
    %265 = vector.extract_strided_slice %3 {offsets = [5, 0], sizes = [1, 128], strides = [1, 1]} : vector<12x128xf32> to vector<1x128xf32>
    %266 = vector.shape_cast %265 : vector<1x128xf32> to vector<128xf32>
    %267 = vector.shape_cast %266 : vector<128xf32> to vector<1x128xf32>
    %268 = vector.broadcast %267 : vector<1x128xf32> to vector<16x128xf32>
    %269 = arith.subf %2, %268 : vector<16x128xf32>
    %270 = vector.extract_strided_slice %5 {offsets = [5, 0], sizes = [1, 128], strides = [1, 1]} : vector<27x128xf32> to vector<1x128xf32>
    %271 = vector.shape_cast %270 : vector<1x128xf32> to vector<128xf32>
    %272 = vector.shape_cast %271 : vector<128xf32> to vector<1x128xf32>
    %273 = vector.broadcast %272 : vector<1x128xf32> to vector<16x128xf32>
    %274 = arith.mulf %269, %273 : vector<16x128xf32>
    %275 = arith.mulf %274, %84 : vector<16x128xf32>
    %276 = vector.extract_strided_slice %3 {offsets = [7, 0], sizes = [1, 128], strides = [1, 1]} : vector<12x128xf32> to vector<1x128xf32>
    %277 = vector.shape_cast %276 : vector<1x128xf32> to vector<128xf32>
    %278 = vector.shape_cast %277 : vector<128xf32> to vector<1x128xf32>
    %279 = vector.broadcast %278 : vector<1x128xf32> to vector<16x128xf32>
    %280 = arith.subf %279, %2 : vector<16x128xf32>
    %281 = vector.extract_strided_slice %6 {offsets = [5, 0], sizes = [1, 128], strides = [1, 1]} : vector<27x128xf32> to vector<1x128xf32>
    %282 = vector.shape_cast %281 : vector<1x128xf32> to vector<128xf32>
    %283 = vector.shape_cast %282 : vector<128xf32> to vector<1x128xf32>
    %284 = vector.broadcast %283 : vector<1x128xf32> to vector<16x128xf32>
    %285 = arith.mulf %280, %284 : vector<16x128xf32>
    %286 = arith.mulf %285, %97 : vector<16x128xf32>
    %287 = arith.addf %275, %286 : vector<16x128xf32>
    %288 = vector.extract_strided_slice %3 {offsets = [6, 0], sizes = [1, 128], strides = [1, 1]} : vector<12x128xf32> to vector<1x128xf32>
    %289 = vector.shape_cast %288 : vector<1x128xf32> to vector<128xf32>
    %290 = vector.shape_cast %289 : vector<128xf32> to vector<1x128xf32>
    %291 = vector.broadcast %290 : vector<1x128xf32> to vector<16x128xf32>
    %292 = arith.subf %2, %291 : vector<16x128xf32>
    %293 = vector.extract_strided_slice %5 {offsets = [6, 0], sizes = [1, 128], strides = [1, 1]} : vector<27x128xf32> to vector<1x128xf32>
    %294 = vector.shape_cast %293 : vector<1x128xf32> to vector<128xf32>
    %295 = vector.shape_cast %294 : vector<128xf32> to vector<1x128xf32>
    %296 = vector.broadcast %295 : vector<1x128xf32> to vector<16x128xf32>
    %297 = arith.mulf %292, %296 : vector<16x128xf32>
    %298 = arith.mulf %297, %97 : vector<16x128xf32>
    %299 = vector.extract_strided_slice %3 {offsets = [8, 0], sizes = [1, 128], strides = [1, 1]} : vector<12x128xf32> to vector<1x128xf32>
    %300 = vector.shape_cast %299 : vector<1x128xf32> to vector<128xf32>
    %301 = vector.shape_cast %300 : vector<128xf32> to vector<1x128xf32>
    %302 = vector.broadcast %301 : vector<1x128xf32> to vector<16x128xf32>
    %303 = arith.subf %302, %2 : vector<16x128xf32>
    %304 = vector.extract_strided_slice %6 {offsets = [6, 0], sizes = [1, 128], strides = [1, 1]} : vector<27x128xf32> to vector<1x128xf32>
    %305 = vector.shape_cast %304 : vector<1x128xf32> to vector<128xf32>
    %306 = vector.shape_cast %305 : vector<128xf32> to vector<1x128xf32>
    %307 = vector.broadcast %306 : vector<1x128xf32> to vector<16x128xf32>
    %308 = arith.mulf %303, %307 : vector<16x128xf32>
    %309 = arith.mulf %308, %110 : vector<16x128xf32>
    %310 = arith.addf %298, %309 : vector<16x128xf32>
    %311 = vector.extract_strided_slice %3 {offsets = [7, 0], sizes = [1, 128], strides = [1, 1]} : vector<12x128xf32> to vector<1x128xf32>
    %312 = vector.shape_cast %311 : vector<1x128xf32> to vector<128xf32>
    %313 = vector.shape_cast %312 : vector<128xf32> to vector<1x128xf32>
    %314 = vector.broadcast %313 : vector<1x128xf32> to vector<16x128xf32>
    %315 = arith.subf %2, %314 : vector<16x128xf32>
    %316 = vector.extract_strided_slice %5 {offsets = [7, 0], sizes = [1, 128], strides = [1, 1]} : vector<27x128xf32> to vector<1x128xf32>
    %317 = vector.shape_cast %316 : vector<1x128xf32> to vector<128xf32>
    %318 = vector.shape_cast %317 : vector<128xf32> to vector<1x128xf32>
    %319 = vector.broadcast %318 : vector<1x128xf32> to vector<16x128xf32>
    %320 = arith.mulf %315, %319 : vector<16x128xf32>
    %321 = arith.mulf %320, %110 : vector<16x128xf32>
    %322 = vector.extract_strided_slice %3 {offsets = [9, 0], sizes = [1, 128], strides = [1, 1]} : vector<12x128xf32> to vector<1x128xf32>
    %323 = vector.shape_cast %322 : vector<1x128xf32> to vector<128xf32>
    %324 = vector.shape_cast %323 : vector<128xf32> to vector<1x128xf32>
    %325 = vector.broadcast %324 : vector<1x128xf32> to vector<16x128xf32>
    %326 = arith.subf %325, %2 : vector<16x128xf32>
    %327 = vector.extract_strided_slice %6 {offsets = [7, 0], sizes = [1, 128], strides = [1, 1]} : vector<27x128xf32> to vector<1x128xf32>
    %328 = vector.shape_cast %327 : vector<1x128xf32> to vector<128xf32>
    %329 = vector.shape_cast %328 : vector<128xf32> to vector<1x128xf32>
    %330 = vector.broadcast %329 : vector<1x128xf32> to vector<16x128xf32>
    %331 = arith.mulf %326, %330 : vector<16x128xf32>
    %332 = arith.mulf %331, %123 : vector<16x128xf32>
    %333 = arith.addf %321, %332 : vector<16x128xf32>
    %334 = vector.extract_strided_slice %3 {offsets = [8, 0], sizes = [1, 128], strides = [1, 1]} : vector<12x128xf32> to vector<1x128xf32>
    %335 = vector.shape_cast %334 : vector<1x128xf32> to vector<128xf32>
    %336 = vector.shape_cast %335 : vector<128xf32> to vector<1x128xf32>
    %337 = vector.broadcast %336 : vector<1x128xf32> to vector<16x128xf32>
    %338 = arith.subf %2, %337 : vector<16x128xf32>
    %339 = vector.extract_strided_slice %5 {offsets = [8, 0], sizes = [1, 128], strides = [1, 1]} : vector<27x128xf32> to vector<1x128xf32>
    %340 = vector.shape_cast %339 : vector<1x128xf32> to vector<128xf32>
    %341 = vector.shape_cast %340 : vector<128xf32> to vector<1x128xf32>
    %342 = vector.broadcast %341 : vector<1x128xf32> to vector<16x128xf32>
    %343 = arith.mulf %338, %342 : vector<16x128xf32>
    %344 = arith.mulf %343, %123 : vector<16x128xf32>
    %345 = vector.extract_strided_slice %3 {offsets = [10, 0], sizes = [1, 128], strides = [1, 1]} : vector<12x128xf32> to vector<1x128xf32>
    %346 = vector.shape_cast %345 : vector<1x128xf32> to vector<128xf32>
    %347 = vector.shape_cast %346 : vector<128xf32> to vector<1x128xf32>
    %348 = vector.broadcast %347 : vector<1x128xf32> to vector<16x128xf32>
    %349 = arith.subf %348, %2 : vector<16x128xf32>
    %350 = vector.extract_strided_slice %6 {offsets = [8, 0], sizes = [1, 128], strides = [1, 1]} : vector<27x128xf32> to vector<1x128xf32>
    %351 = vector.shape_cast %350 : vector<1x128xf32> to vector<128xf32>
    %352 = vector.shape_cast %351 : vector<128xf32> to vector<1x128xf32>
    %353 = vector.broadcast %352 : vector<1x128xf32> to vector<16x128xf32>
    %354 = arith.mulf %349, %353 : vector<16x128xf32>
    %355 = arith.mulf %354, %136 : vector<16x128xf32>
    %356 = arith.addf %344, %355 : vector<16x128xf32>
    %357 = vector.extract_strided_slice %3 {offsets = [9, 0], sizes = [1, 128], strides = [1, 1]} : vector<12x128xf32> to vector<1x128xf32>
    %358 = vector.shape_cast %357 : vector<1x128xf32> to vector<128xf32>
    %359 = vector.shape_cast %358 : vector<128xf32> to vector<1x128xf32>
    %360 = vector.broadcast %359 : vector<1x128xf32> to vector<16x128xf32>
    %361 = arith.subf %2, %360 : vector<16x128xf32>
    %362 = vector.extract_strided_slice %5 {offsets = [9, 0], sizes = [1, 128], strides = [1, 1]} : vector<27x128xf32> to vector<1x128xf32>
    %363 = vector.shape_cast %362 : vector<1x128xf32> to vector<128xf32>
    %364 = vector.shape_cast %363 : vector<128xf32> to vector<1x128xf32>
    %365 = vector.broadcast %364 : vector<1x128xf32> to vector<16x128xf32>
    %366 = arith.mulf %361, %365 : vector<16x128xf32>
    %367 = arith.mulf %366, %136 : vector<16x128xf32>
    %368 = vector.extract_strided_slice %3 {offsets = [11, 0], sizes = [1, 128], strides = [1, 1]} : vector<12x128xf32> to vector<1x128xf32>
    %369 = vector.shape_cast %368 : vector<1x128xf32> to vector<128xf32>
    %370 = vector.shape_cast %369 : vector<128xf32> to vector<1x128xf32>
    %371 = vector.broadcast %370 : vector<1x128xf32> to vector<16x128xf32>
    %372 = arith.subf %371, %2 : vector<16x128xf32>
    %373 = vector.extract_strided_slice %6 {offsets = [9, 0], sizes = [1, 128], strides = [1, 1]} : vector<27x128xf32> to vector<1x128xf32>
    %374 = vector.shape_cast %373 : vector<1x128xf32> to vector<128xf32>
    %375 = vector.shape_cast %374 : vector<128xf32> to vector<1x128xf32>
    %376 = vector.broadcast %375 : vector<1x128xf32> to vector<16x128xf32>
    %377 = arith.mulf %372, %376 : vector<16x128xf32>
    %378 = arith.mulf %377, %149 : vector<16x128xf32>
    %379 = arith.addf %367, %378 : vector<16x128xf32>
    %380 = vector.extract_strided_slice %3 {offsets = [0, 0], sizes = [1, 128], strides = [1, 1]} : vector<12x128xf32> to vector<1x128xf32>
    %381 = vector.shape_cast %380 : vector<1x128xf32> to vector<128xf32>
    %382 = vector.shape_cast %381 : vector<128xf32> to vector<1x128xf32>
    %383 = vector.broadcast %382 : vector<1x128xf32> to vector<16x128xf32>
    %384 = arith.subf %2, %383 : vector<16x128xf32>
    %385 = vector.extract_strided_slice %5 {offsets = [10, 0], sizes = [1, 128], strides = [1, 1]} : vector<27x128xf32> to vector<1x128xf32>
    %386 = vector.shape_cast %385 : vector<1x128xf32> to vector<128xf32>
    %387 = vector.shape_cast %386 : vector<128xf32> to vector<1x128xf32>
    %388 = vector.broadcast %387 : vector<1x128xf32> to vector<16x128xf32>
    %389 = arith.mulf %384, %388 : vector<16x128xf32>
    %390 = arith.mulf %389, %172 : vector<16x128xf32>
    %391 = vector.extract_strided_slice %3 {offsets = [3, 0], sizes = [1, 128], strides = [1, 1]} : vector<12x128xf32> to vector<1x128xf32>
    %392 = vector.shape_cast %391 : vector<1x128xf32> to vector<128xf32>
    %393 = vector.shape_cast %392 : vector<128xf32> to vector<1x128xf32>
    %394 = vector.broadcast %393 : vector<1x128xf32> to vector<16x128xf32>
    %395 = arith.subf %394, %2 : vector<16x128xf32>
    %396 = vector.extract_strided_slice %6 {offsets = [10, 0], sizes = [1, 128], strides = [1, 1]} : vector<27x128xf32> to vector<1x128xf32>
    %397 = vector.shape_cast %396 : vector<1x128xf32> to vector<128xf32>
    %398 = vector.shape_cast %397 : vector<128xf32> to vector<1x128xf32>
    %399 = vector.broadcast %398 : vector<1x128xf32> to vector<16x128xf32>
    %400 = arith.mulf %395, %399 : vector<16x128xf32>
    %401 = arith.mulf %400, %195 : vector<16x128xf32>
    %402 = arith.addf %390, %401 : vector<16x128xf32>
    %403 = vector.extract_strided_slice %3 {offsets = [1, 0], sizes = [1, 128], strides = [1, 1]} : vector<12x128xf32> to vector<1x128xf32>
    %404 = vector.shape_cast %403 : vector<1x128xf32> to vector<128xf32>
    %405 = vector.shape_cast %404 : vector<128xf32> to vector<1x128xf32>
    %406 = vector.broadcast %405 : vector<1x128xf32> to vector<16x128xf32>
    %407 = arith.subf %2, %406 : vector<16x128xf32>
    %408 = vector.extract_strided_slice %5 {offsets = [11, 0], sizes = [1, 128], strides = [1, 1]} : vector<27x128xf32> to vector<1x128xf32>
    %409 = vector.shape_cast %408 : vector<1x128xf32> to vector<128xf32>
    %410 = vector.shape_cast %409 : vector<128xf32> to vector<1x128xf32>
    %411 = vector.broadcast %410 : vector<1x128xf32> to vector<16x128xf32>
    %412 = arith.mulf %407, %411 : vector<16x128xf32>
    %413 = arith.mulf %412, %195 : vector<16x128xf32>
    %414 = vector.extract_strided_slice %3 {offsets = [4, 0], sizes = [1, 128], strides = [1, 1]} : vector<12x128xf32> to vector<1x128xf32>
    %415 = vector.shape_cast %414 : vector<1x128xf32> to vector<128xf32>
    %416 = vector.shape_cast %415 : vector<128xf32> to vector<1x128xf32>
    %417 = vector.broadcast %416 : vector<1x128xf32> to vector<16x128xf32>
    %418 = arith.subf %417, %2 : vector<16x128xf32>
    %419 = vector.extract_strided_slice %6 {offsets = [11, 0], sizes = [1, 128], strides = [1, 1]} : vector<27x128xf32> to vector<1x128xf32>
    %420 = vector.shape_cast %419 : vector<1x128xf32> to vector<128xf32>
    %421 = vector.shape_cast %420 : vector<128xf32> to vector<1x128xf32>
    %422 = vector.broadcast %421 : vector<1x128xf32> to vector<16x128xf32>
    %423 = arith.mulf %418, %422 : vector<16x128xf32>
    %424 = arith.mulf %423, %218 : vector<16x128xf32>
    %425 = arith.addf %413, %424 : vector<16x128xf32>
    %426 = vector.extract_strided_slice %3 {offsets = [2, 0], sizes = [1, 128], strides = [1, 1]} : vector<12x128xf32> to vector<1x128xf32>
    %427 = vector.shape_cast %426 : vector<1x128xf32> to vector<128xf32>
    %428 = vector.shape_cast %427 : vector<128xf32> to vector<1x128xf32>
    %429 = vector.broadcast %428 : vector<1x128xf32> to vector<16x128xf32>
    %430 = arith.subf %2, %429 : vector<16x128xf32>
    %431 = vector.extract_strided_slice %5 {offsets = [12, 0], sizes = [1, 128], strides = [1, 1]} : vector<27x128xf32> to vector<1x128xf32>
    %432 = vector.shape_cast %431 : vector<1x128xf32> to vector<128xf32>
    %433 = vector.shape_cast %432 : vector<128xf32> to vector<1x128xf32>
    %434 = vector.broadcast %433 : vector<1x128xf32> to vector<16x128xf32>
    %435 = arith.mulf %430, %434 : vector<16x128xf32>
    %436 = arith.mulf %435, %218 : vector<16x128xf32>
    %437 = vector.extract_strided_slice %3 {offsets = [5, 0], sizes = [1, 128], strides = [1, 1]} : vector<12x128xf32> to vector<1x128xf32>
    %438 = vector.shape_cast %437 : vector<1x128xf32> to vector<128xf32>
    %439 = vector.shape_cast %438 : vector<128xf32> to vector<1x128xf32>
    %440 = vector.broadcast %439 : vector<1x128xf32> to vector<16x128xf32>
    %441 = arith.subf %440, %2 : vector<16x128xf32>
    %442 = vector.extract_strided_slice %6 {offsets = [12, 0], sizes = [1, 128], strides = [1, 1]} : vector<27x128xf32> to vector<1x128xf32>
    %443 = vector.shape_cast %442 : vector<1x128xf32> to vector<128xf32>
    %444 = vector.shape_cast %443 : vector<128xf32> to vector<1x128xf32>
    %445 = vector.broadcast %444 : vector<1x128xf32> to vector<16x128xf32>
    %446 = arith.mulf %441, %445 : vector<16x128xf32>
    %447 = arith.mulf %446, %241 : vector<16x128xf32>
    %448 = arith.addf %436, %447 : vector<16x128xf32>
    %449 = vector.extract_strided_slice %3 {offsets = [3, 0], sizes = [1, 128], strides = [1, 1]} : vector<12x128xf32> to vector<1x128xf32>
    %450 = vector.shape_cast %449 : vector<1x128xf32> to vector<128xf32>
    %451 = vector.shape_cast %450 : vector<128xf32> to vector<1x128xf32>
    %452 = vector.broadcast %451 : vector<1x128xf32> to vector<16x128xf32>
    %453 = arith.subf %2, %452 : vector<16x128xf32>
    %454 = vector.extract_strided_slice %5 {offsets = [13, 0], sizes = [1, 128], strides = [1, 1]} : vector<27x128xf32> to vector<1x128xf32>
    %455 = vector.shape_cast %454 : vector<1x128xf32> to vector<128xf32>
    %456 = vector.shape_cast %455 : vector<128xf32> to vector<1x128xf32>
    %457 = vector.broadcast %456 : vector<1x128xf32> to vector<16x128xf32>
    %458 = arith.mulf %453, %457 : vector<16x128xf32>
    %459 = arith.mulf %458, %241 : vector<16x128xf32>
    %460 = vector.extract_strided_slice %3 {offsets = [6, 0], sizes = [1, 128], strides = [1, 1]} : vector<12x128xf32> to vector<1x128xf32>
    %461 = vector.shape_cast %460 : vector<1x128xf32> to vector<128xf32>
    %462 = vector.shape_cast %461 : vector<128xf32> to vector<1x128xf32>
    %463 = vector.broadcast %462 : vector<1x128xf32> to vector<16x128xf32>
    %464 = arith.subf %463, %2 : vector<16x128xf32>
    %465 = vector.extract_strided_slice %6 {offsets = [13, 0], sizes = [1, 128], strides = [1, 1]} : vector<27x128xf32> to vector<1x128xf32>
    %466 = vector.shape_cast %465 : vector<1x128xf32> to vector<128xf32>
    %467 = vector.shape_cast %466 : vector<128xf32> to vector<1x128xf32>
    %468 = vector.broadcast %467 : vector<1x128xf32> to vector<16x128xf32>
    %469 = arith.mulf %464, %468 : vector<16x128xf32>
    %470 = arith.mulf %469, %264 : vector<16x128xf32>
    %471 = arith.addf %459, %470 : vector<16x128xf32>
    %472 = vector.extract_strided_slice %3 {offsets = [4, 0], sizes = [1, 128], strides = [1, 1]} : vector<12x128xf32> to vector<1x128xf32>
    %473 = vector.shape_cast %472 : vector<1x128xf32> to vector<128xf32>
    %474 = vector.shape_cast %473 : vector<128xf32> to vector<1x128xf32>
    %475 = vector.broadcast %474 : vector<1x128xf32> to vector<16x128xf32>
    %476 = arith.subf %2, %475 : vector<16x128xf32>
    %477 = vector.extract_strided_slice %5 {offsets = [14, 0], sizes = [1, 128], strides = [1, 1]} : vector<27x128xf32> to vector<1x128xf32>
    %478 = vector.shape_cast %477 : vector<1x128xf32> to vector<128xf32>
    %479 = vector.shape_cast %478 : vector<128xf32> to vector<1x128xf32>
    %480 = vector.broadcast %479 : vector<1x128xf32> to vector<16x128xf32>
    %481 = arith.mulf %476, %480 : vector<16x128xf32>
    %482 = arith.mulf %481, %264 : vector<16x128xf32>
    %483 = vector.extract_strided_slice %3 {offsets = [7, 0], sizes = [1, 128], strides = [1, 1]} : vector<12x128xf32> to vector<1x128xf32>
    %484 = vector.shape_cast %483 : vector<1x128xf32> to vector<128xf32>
    %485 = vector.shape_cast %484 : vector<128xf32> to vector<1x128xf32>
    %486 = vector.broadcast %485 : vector<1x128xf32> to vector<16x128xf32>
    %487 = arith.subf %486, %2 : vector<16x128xf32>
    %488 = vector.extract_strided_slice %6 {offsets = [14, 0], sizes = [1, 128], strides = [1, 1]} : vector<27x128xf32> to vector<1x128xf32>
    %489 = vector.shape_cast %488 : vector<1x128xf32> to vector<128xf32>
    %490 = vector.shape_cast %489 : vector<128xf32> to vector<1x128xf32>
    %491 = vector.broadcast %490 : vector<1x128xf32> to vector<16x128xf32>
    %492 = arith.mulf %487, %491 : vector<16x128xf32>
    %493 = arith.mulf %492, %287 : vector<16x128xf32>
    %494 = arith.addf %482, %493 : vector<16x128xf32>
    %495 = vector.extract_strided_slice %3 {offsets = [5, 0], sizes = [1, 128], strides = [1, 1]} : vector<12x128xf32> to vector<1x128xf32>
    %496 = vector.shape_cast %495 : vector<1x128xf32> to vector<128xf32>
    %497 = vector.shape_cast %496 : vector<128xf32> to vector<1x128xf32>
    %498 = vector.broadcast %497 : vector<1x128xf32> to vector<16x128xf32>
    %499 = arith.subf %2, %498 : vector<16x128xf32>
    %500 = vector.extract_strided_slice %5 {offsets = [15, 0], sizes = [1, 128], strides = [1, 1]} : vector<27x128xf32> to vector<1x128xf32>
    %501 = vector.shape_cast %500 : vector<1x128xf32> to vector<128xf32>
    %502 = vector.shape_cast %501 : vector<128xf32> to vector<1x128xf32>
    %503 = vector.broadcast %502 : vector<1x128xf32> to vector<16x128xf32>
    %504 = arith.mulf %499, %503 : vector<16x128xf32>
    %505 = arith.mulf %504, %287 : vector<16x128xf32>
    %506 = vector.extract_strided_slice %3 {offsets = [8, 0], sizes = [1, 128], strides = [1, 1]} : vector<12x128xf32> to vector<1x128xf32>
    %507 = vector.shape_cast %506 : vector<1x128xf32> to vector<128xf32>
    %508 = vector.shape_cast %507 : vector<128xf32> to vector<1x128xf32>
    %509 = vector.broadcast %508 : vector<1x128xf32> to vector<16x128xf32>
    %510 = arith.subf %509, %2 : vector<16x128xf32>
    %511 = vector.extract_strided_slice %6 {offsets = [15, 0], sizes = [1, 128], strides = [1, 1]} : vector<27x128xf32> to vector<1x128xf32>
    %512 = vector.shape_cast %511 : vector<1x128xf32> to vector<128xf32>
    %513 = vector.shape_cast %512 : vector<128xf32> to vector<1x128xf32>
    %514 = vector.broadcast %513 : vector<1x128xf32> to vector<16x128xf32>
    %515 = arith.mulf %510, %514 : vector<16x128xf32>
    %516 = arith.mulf %515, %310 : vector<16x128xf32>
    %517 = arith.addf %505, %516 : vector<16x128xf32>
    %518 = vector.extract_strided_slice %3 {offsets = [6, 0], sizes = [1, 128], strides = [1, 1]} : vector<12x128xf32> to vector<1x128xf32>
    %519 = vector.shape_cast %518 : vector<1x128xf32> to vector<128xf32>
    %520 = vector.shape_cast %519 : vector<128xf32> to vector<1x128xf32>
    %521 = vector.broadcast %520 : vector<1x128xf32> to vector<16x128xf32>
    %522 = arith.subf %2, %521 : vector<16x128xf32>
    %523 = vector.extract_strided_slice %5 {offsets = [16, 0], sizes = [1, 128], strides = [1, 1]} : vector<27x128xf32> to vector<1x128xf32>
    %524 = vector.shape_cast %523 : vector<1x128xf32> to vector<128xf32>
    %525 = vector.shape_cast %524 : vector<128xf32> to vector<1x128xf32>
    %526 = vector.broadcast %525 : vector<1x128xf32> to vector<16x128xf32>
    %527 = arith.mulf %522, %526 : vector<16x128xf32>
    %528 = arith.mulf %527, %310 : vector<16x128xf32>
    %529 = vector.extract_strided_slice %3 {offsets = [9, 0], sizes = [1, 128], strides = [1, 1]} : vector<12x128xf32> to vector<1x128xf32>
    %530 = vector.shape_cast %529 : vector<1x128xf32> to vector<128xf32>
    %531 = vector.shape_cast %530 : vector<128xf32> to vector<1x128xf32>
    %532 = vector.broadcast %531 : vector<1x128xf32> to vector<16x128xf32>
    %533 = arith.subf %532, %2 : vector<16x128xf32>
    %534 = vector.extract_strided_slice %6 {offsets = [16, 0], sizes = [1, 128], strides = [1, 1]} : vector<27x128xf32> to vector<1x128xf32>
    %535 = vector.shape_cast %534 : vector<1x128xf32> to vector<128xf32>
    %536 = vector.shape_cast %535 : vector<128xf32> to vector<1x128xf32>
    %537 = vector.broadcast %536 : vector<1x128xf32> to vector<16x128xf32>
    %538 = arith.mulf %533, %537 : vector<16x128xf32>
    %539 = arith.mulf %538, %333 : vector<16x128xf32>
    %540 = arith.addf %528, %539 : vector<16x128xf32>
    %541 = vector.extract_strided_slice %3 {offsets = [7, 0], sizes = [1, 128], strides = [1, 1]} : vector<12x128xf32> to vector<1x128xf32>
    %542 = vector.shape_cast %541 : vector<1x128xf32> to vector<128xf32>
    %543 = vector.shape_cast %542 : vector<128xf32> to vector<1x128xf32>
    %544 = vector.broadcast %543 : vector<1x128xf32> to vector<16x128xf32>
    %545 = arith.subf %2, %544 : vector<16x128xf32>
    %546 = vector.extract_strided_slice %5 {offsets = [17, 0], sizes = [1, 128], strides = [1, 1]} : vector<27x128xf32> to vector<1x128xf32>
    %547 = vector.shape_cast %546 : vector<1x128xf32> to vector<128xf32>
    %548 = vector.shape_cast %547 : vector<128xf32> to vector<1x128xf32>
    %549 = vector.broadcast %548 : vector<1x128xf32> to vector<16x128xf32>
    %550 = arith.mulf %545, %549 : vector<16x128xf32>
    %551 = arith.mulf %550, %333 : vector<16x128xf32>
    %552 = vector.extract_strided_slice %3 {offsets = [10, 0], sizes = [1, 128], strides = [1, 1]} : vector<12x128xf32> to vector<1x128xf32>
    %553 = vector.shape_cast %552 : vector<1x128xf32> to vector<128xf32>
    %554 = vector.shape_cast %553 : vector<128xf32> to vector<1x128xf32>
    %555 = vector.broadcast %554 : vector<1x128xf32> to vector<16x128xf32>
    %556 = arith.subf %555, %2 : vector<16x128xf32>
    %557 = vector.extract_strided_slice %6 {offsets = [17, 0], sizes = [1, 128], strides = [1, 1]} : vector<27x128xf32> to vector<1x128xf32>
    %558 = vector.shape_cast %557 : vector<1x128xf32> to vector<128xf32>
    %559 = vector.shape_cast %558 : vector<128xf32> to vector<1x128xf32>
    %560 = vector.broadcast %559 : vector<1x128xf32> to vector<16x128xf32>
    %561 = arith.mulf %556, %560 : vector<16x128xf32>
    %562 = arith.mulf %561, %356 : vector<16x128xf32>
    %563 = arith.addf %551, %562 : vector<16x128xf32>
    %564 = vector.extract_strided_slice %3 {offsets = [8, 0], sizes = [1, 128], strides = [1, 1]} : vector<12x128xf32> to vector<1x128xf32>
    %565 = vector.shape_cast %564 : vector<1x128xf32> to vector<128xf32>
    %566 = vector.shape_cast %565 : vector<128xf32> to vector<1x128xf32>
    %567 = vector.broadcast %566 : vector<1x128xf32> to vector<16x128xf32>
    %568 = arith.subf %2, %567 : vector<16x128xf32>
    %569 = vector.extract_strided_slice %5 {offsets = [18, 0], sizes = [1, 128], strides = [1, 1]} : vector<27x128xf32> to vector<1x128xf32>
    %570 = vector.shape_cast %569 : vector<1x128xf32> to vector<128xf32>
    %571 = vector.shape_cast %570 : vector<128xf32> to vector<1x128xf32>
    %572 = vector.broadcast %571 : vector<1x128xf32> to vector<16x128xf32>
    %573 = arith.mulf %568, %572 : vector<16x128xf32>
    %574 = arith.mulf %573, %356 : vector<16x128xf32>
    %575 = vector.extract_strided_slice %3 {offsets = [11, 0], sizes = [1, 128], strides = [1, 1]} : vector<12x128xf32> to vector<1x128xf32>
    %576 = vector.shape_cast %575 : vector<1x128xf32> to vector<128xf32>
    %577 = vector.shape_cast %576 : vector<128xf32> to vector<1x128xf32>
    %578 = vector.broadcast %577 : vector<1x128xf32> to vector<16x128xf32>
    %579 = arith.subf %578, %2 : vector<16x128xf32>
    %580 = vector.extract_strided_slice %6 {offsets = [18, 0], sizes = [1, 128], strides = [1, 1]} : vector<27x128xf32> to vector<1x128xf32>
    %581 = vector.shape_cast %580 : vector<1x128xf32> to vector<128xf32>
    %582 = vector.shape_cast %581 : vector<128xf32> to vector<1x128xf32>
    %583 = vector.broadcast %582 : vector<1x128xf32> to vector<16x128xf32>
    %584 = arith.mulf %579, %583 : vector<16x128xf32>
    %585 = arith.mulf %584, %379 : vector<16x128xf32>
    %586 = arith.addf %574, %585 : vector<16x128xf32>
    %587 = vector.extract_strided_slice %3 {offsets = [0, 0], sizes = [1, 128], strides = [1, 1]} : vector<12x128xf32> to vector<1x128xf32>
    %588 = vector.shape_cast %587 : vector<1x128xf32> to vector<128xf32>
    %589 = vector.shape_cast %588 : vector<128xf32> to vector<1x128xf32>
    %590 = vector.broadcast %589 : vector<1x128xf32> to vector<16x128xf32>
    %591 = arith.subf %2, %590 : vector<16x128xf32>
    %592 = vector.extract_strided_slice %5 {offsets = [19, 0], sizes = [1, 128], strides = [1, 1]} : vector<27x128xf32> to vector<1x128xf32>
    %593 = vector.shape_cast %592 : vector<1x128xf32> to vector<128xf32>
    %594 = vector.shape_cast %593 : vector<128xf32> to vector<1x128xf32>
    %595 = vector.broadcast %594 : vector<1x128xf32> to vector<16x128xf32>
    %596 = arith.mulf %591, %595 : vector<16x128xf32>
    %597 = arith.mulf %596, %402 : vector<16x128xf32>
    %598 = vector.extract_strided_slice %3 {offsets = [4, 0], sizes = [1, 128], strides = [1, 1]} : vector<12x128xf32> to vector<1x128xf32>
    %599 = vector.shape_cast %598 : vector<1x128xf32> to vector<128xf32>
    %600 = vector.shape_cast %599 : vector<128xf32> to vector<1x128xf32>
    %601 = vector.broadcast %600 : vector<1x128xf32> to vector<16x128xf32>
    %602 = arith.subf %601, %2 : vector<16x128xf32>
    %603 = vector.extract_strided_slice %6 {offsets = [19, 0], sizes = [1, 128], strides = [1, 1]} : vector<27x128xf32> to vector<1x128xf32>
    %604 = vector.shape_cast %603 : vector<1x128xf32> to vector<128xf32>
    %605 = vector.shape_cast %604 : vector<128xf32> to vector<1x128xf32>
    %606 = vector.broadcast %605 : vector<1x128xf32> to vector<16x128xf32>
    %607 = arith.mulf %602, %606 : vector<16x128xf32>
    %608 = arith.mulf %607, %425 : vector<16x128xf32>
    %609 = arith.addf %597, %608 : vector<16x128xf32>
    %610 = vector.extract_strided_slice %3 {offsets = [1, 0], sizes = [1, 128], strides = [1, 1]} : vector<12x128xf32> to vector<1x128xf32>
    %611 = vector.shape_cast %610 : vector<1x128xf32> to vector<128xf32>
    %612 = vector.shape_cast %611 : vector<128xf32> to vector<1x128xf32>
    %613 = vector.broadcast %612 : vector<1x128xf32> to vector<16x128xf32>
    %614 = arith.subf %2, %613 : vector<16x128xf32>
    %615 = vector.extract_strided_slice %5 {offsets = [20, 0], sizes = [1, 128], strides = [1, 1]} : vector<27x128xf32> to vector<1x128xf32>
    %616 = vector.shape_cast %615 : vector<1x128xf32> to vector<128xf32>
    %617 = vector.shape_cast %616 : vector<128xf32> to vector<1x128xf32>
    %618 = vector.broadcast %617 : vector<1x128xf32> to vector<16x128xf32>
    %619 = arith.mulf %614, %618 : vector<16x128xf32>
    %620 = arith.mulf %619, %425 : vector<16x128xf32>
    %621 = vector.extract_strided_slice %3 {offsets = [5, 0], sizes = [1, 128], strides = [1, 1]} : vector<12x128xf32> to vector<1x128xf32>
    %622 = vector.shape_cast %621 : vector<1x128xf32> to vector<128xf32>
    %623 = vector.shape_cast %622 : vector<128xf32> to vector<1x128xf32>
    %624 = vector.broadcast %623 : vector<1x128xf32> to vector<16x128xf32>
    %625 = arith.subf %624, %2 : vector<16x128xf32>
    %626 = vector.extract_strided_slice %6 {offsets = [20, 0], sizes = [1, 128], strides = [1, 1]} : vector<27x128xf32> to vector<1x128xf32>
    %627 = vector.shape_cast %626 : vector<1x128xf32> to vector<128xf32>
    %628 = vector.shape_cast %627 : vector<128xf32> to vector<1x128xf32>
    %629 = vector.broadcast %628 : vector<1x128xf32> to vector<16x128xf32>
    %630 = arith.mulf %625, %629 : vector<16x128xf32>
    %631 = arith.mulf %630, %448 : vector<16x128xf32>
    %632 = arith.addf %620, %631 : vector<16x128xf32>
    %633 = vector.extract_strided_slice %3 {offsets = [2, 0], sizes = [1, 128], strides = [1, 1]} : vector<12x128xf32> to vector<1x128xf32>
    %634 = vector.shape_cast %633 : vector<1x128xf32> to vector<128xf32>
    %635 = vector.shape_cast %634 : vector<128xf32> to vector<1x128xf32>
    %636 = vector.broadcast %635 : vector<1x128xf32> to vector<16x128xf32>
    %637 = arith.subf %2, %636 : vector<16x128xf32>
    %638 = vector.extract_strided_slice %5 {offsets = [21, 0], sizes = [1, 128], strides = [1, 1]} : vector<27x128xf32> to vector<1x128xf32>
    %639 = vector.shape_cast %638 : vector<1x128xf32> to vector<128xf32>
    %640 = vector.shape_cast %639 : vector<128xf32> to vector<1x128xf32>
    %641 = vector.broadcast %640 : vector<1x128xf32> to vector<16x128xf32>
    %642 = arith.mulf %637, %641 : vector<16x128xf32>
    %643 = arith.mulf %642, %448 : vector<16x128xf32>
    %644 = vector.extract_strided_slice %3 {offsets = [6, 0], sizes = [1, 128], strides = [1, 1]} : vector<12x128xf32> to vector<1x128xf32>
    %645 = vector.shape_cast %644 : vector<1x128xf32> to vector<128xf32>
    %646 = vector.shape_cast %645 : vector<128xf32> to vector<1x128xf32>
    %647 = vector.broadcast %646 : vector<1x128xf32> to vector<16x128xf32>
    %648 = arith.subf %647, %2 : vector<16x128xf32>
    %649 = vector.extract_strided_slice %6 {offsets = [21, 0], sizes = [1, 128], strides = [1, 1]} : vector<27x128xf32> to vector<1x128xf32>
    %650 = vector.shape_cast %649 : vector<1x128xf32> to vector<128xf32>
    %651 = vector.shape_cast %650 : vector<128xf32> to vector<1x128xf32>
    %652 = vector.broadcast %651 : vector<1x128xf32> to vector<16x128xf32>
    %653 = arith.mulf %648, %652 : vector<16x128xf32>
    %654 = arith.mulf %653, %471 : vector<16x128xf32>
    %655 = arith.addf %643, %654 : vector<16x128xf32>
    %656 = vector.extract_strided_slice %3 {offsets = [3, 0], sizes = [1, 128], strides = [1, 1]} : vector<12x128xf32> to vector<1x128xf32>
    %657 = vector.shape_cast %656 : vector<1x128xf32> to vector<128xf32>
    %658 = vector.shape_cast %657 : vector<128xf32> to vector<1x128xf32>
    %659 = vector.broadcast %658 : vector<1x128xf32> to vector<16x128xf32>
    %660 = arith.subf %2, %659 : vector<16x128xf32>
    %661 = vector.extract_strided_slice %5 {offsets = [22, 0], sizes = [1, 128], strides = [1, 1]} : vector<27x128xf32> to vector<1x128xf32>
    %662 = vector.shape_cast %661 : vector<1x128xf32> to vector<128xf32>
    %663 = vector.shape_cast %662 : vector<128xf32> to vector<1x128xf32>
    %664 = vector.broadcast %663 : vector<1x128xf32> to vector<16x128xf32>
    %665 = arith.mulf %660, %664 : vector<16x128xf32>
    %666 = arith.mulf %665, %471 : vector<16x128xf32>
    %667 = vector.extract_strided_slice %3 {offsets = [7, 0], sizes = [1, 128], strides = [1, 1]} : vector<12x128xf32> to vector<1x128xf32>
    %668 = vector.shape_cast %667 : vector<1x128xf32> to vector<128xf32>
    %669 = vector.shape_cast %668 : vector<128xf32> to vector<1x128xf32>
    %670 = vector.broadcast %669 : vector<1x128xf32> to vector<16x128xf32>
    %671 = arith.subf %670, %2 : vector<16x128xf32>
    %672 = vector.extract_strided_slice %6 {offsets = [22, 0], sizes = [1, 128], strides = [1, 1]} : vector<27x128xf32> to vector<1x128xf32>
    %673 = vector.shape_cast %672 : vector<1x128xf32> to vector<128xf32>
    %674 = vector.shape_cast %673 : vector<128xf32> to vector<1x128xf32>
    %675 = vector.broadcast %674 : vector<1x128xf32> to vector<16x128xf32>
    %676 = arith.mulf %671, %675 : vector<16x128xf32>
    %677 = arith.mulf %676, %494 : vector<16x128xf32>
    %678 = arith.addf %666, %677 : vector<16x128xf32>
    %679 = vector.extract_strided_slice %3 {offsets = [4, 0], sizes = [1, 128], strides = [1, 1]} : vector<12x128xf32> to vector<1x128xf32>
    %680 = vector.shape_cast %679 : vector<1x128xf32> to vector<128xf32>
    %681 = vector.shape_cast %680 : vector<128xf32> to vector<1x128xf32>
    %682 = vector.broadcast %681 : vector<1x128xf32> to vector<16x128xf32>
    %683 = arith.subf %2, %682 : vector<16x128xf32>
    %684 = vector.extract_strided_slice %5 {offsets = [23, 0], sizes = [1, 128], strides = [1, 1]} : vector<27x128xf32> to vector<1x128xf32>
    %685 = vector.shape_cast %684 : vector<1x128xf32> to vector<128xf32>
    %686 = vector.shape_cast %685 : vector<128xf32> to vector<1x128xf32>
    %687 = vector.broadcast %686 : vector<1x128xf32> to vector<16x128xf32>
    %688 = arith.mulf %683, %687 : vector<16x128xf32>
    %689 = arith.mulf %688, %494 : vector<16x128xf32>
    %690 = vector.extract_strided_slice %3 {offsets = [8, 0], sizes = [1, 128], strides = [1, 1]} : vector<12x128xf32> to vector<1x128xf32>
    %691 = vector.shape_cast %690 : vector<1x128xf32> to vector<128xf32>
    %692 = vector.shape_cast %691 : vector<128xf32> to vector<1x128xf32>
    %693 = vector.broadcast %692 : vector<1x128xf32> to vector<16x128xf32>
    %694 = arith.subf %693, %2 : vector<16x128xf32>
    %695 = vector.extract_strided_slice %6 {offsets = [23, 0], sizes = [1, 128], strides = [1, 1]} : vector<27x128xf32> to vector<1x128xf32>
    %696 = vector.shape_cast %695 : vector<1x128xf32> to vector<128xf32>
    %697 = vector.shape_cast %696 : vector<128xf32> to vector<1x128xf32>
    %698 = vector.broadcast %697 : vector<1x128xf32> to vector<16x128xf32>
    %699 = arith.mulf %694, %698 : vector<16x128xf32>
    %700 = arith.mulf %699, %517 : vector<16x128xf32>
    %701 = arith.addf %689, %700 : vector<16x128xf32>
    %702 = vector.extract_strided_slice %3 {offsets = [5, 0], sizes = [1, 128], strides = [1, 1]} : vector<12x128xf32> to vector<1x128xf32>
    %703 = vector.shape_cast %702 : vector<1x128xf32> to vector<128xf32>
    %704 = vector.shape_cast %703 : vector<128xf32> to vector<1x128xf32>
    %705 = vector.broadcast %704 : vector<1x128xf32> to vector<16x128xf32>
    %706 = arith.subf %2, %705 : vector<16x128xf32>
    %707 = vector.extract_strided_slice %5 {offsets = [24, 0], sizes = [1, 128], strides = [1, 1]} : vector<27x128xf32> to vector<1x128xf32>
    %708 = vector.shape_cast %707 : vector<1x128xf32> to vector<128xf32>
    %709 = vector.shape_cast %708 : vector<128xf32> to vector<1x128xf32>
    %710 = vector.broadcast %709 : vector<1x128xf32> to vector<16x128xf32>
    %711 = arith.mulf %706, %710 : vector<16x128xf32>
    %712 = arith.mulf %711, %517 : vector<16x128xf32>
    %713 = vector.extract_strided_slice %3 {offsets = [9, 0], sizes = [1, 128], strides = [1, 1]} : vector<12x128xf32> to vector<1x128xf32>
    %714 = vector.shape_cast %713 : vector<1x128xf32> to vector<128xf32>
    %715 = vector.shape_cast %714 : vector<128xf32> to vector<1x128xf32>
    %716 = vector.broadcast %715 : vector<1x128xf32> to vector<16x128xf32>
    %717 = arith.subf %716, %2 : vector<16x128xf32>
    %718 = vector.extract_strided_slice %6 {offsets = [24, 0], sizes = [1, 128], strides = [1, 1]} : vector<27x128xf32> to vector<1x128xf32>
    %719 = vector.shape_cast %718 : vector<1x128xf32> to vector<128xf32>
    %720 = vector.shape_cast %719 : vector<128xf32> to vector<1x128xf32>
    %721 = vector.broadcast %720 : vector<1x128xf32> to vector<16x128xf32>
    %722 = arith.mulf %717, %721 : vector<16x128xf32>
    %723 = arith.mulf %722, %540 : vector<16x128xf32>
    %724 = arith.addf %712, %723 : vector<16x128xf32>
    %725 = vector.extract_strided_slice %3 {offsets = [6, 0], sizes = [1, 128], strides = [1, 1]} : vector<12x128xf32> to vector<1x128xf32>
    %726 = vector.shape_cast %725 : vector<1x128xf32> to vector<128xf32>
    %727 = vector.shape_cast %726 : vector<128xf32> to vector<1x128xf32>
    %728 = vector.broadcast %727 : vector<1x128xf32> to vector<16x128xf32>
    %729 = arith.subf %2, %728 : vector<16x128xf32>
    %730 = vector.extract_strided_slice %5 {offsets = [25, 0], sizes = [1, 128], strides = [1, 1]} : vector<27x128xf32> to vector<1x128xf32>
    %731 = vector.shape_cast %730 : vector<1x128xf32> to vector<128xf32>
    %732 = vector.shape_cast %731 : vector<128xf32> to vector<1x128xf32>
    %733 = vector.broadcast %732 : vector<1x128xf32> to vector<16x128xf32>
    %734 = arith.mulf %729, %733 : vector<16x128xf32>
    %735 = arith.mulf %734, %540 : vector<16x128xf32>
    %736 = vector.extract_strided_slice %3 {offsets = [10, 0], sizes = [1, 128], strides = [1, 1]} : vector<12x128xf32> to vector<1x128xf32>
    %737 = vector.shape_cast %736 : vector<1x128xf32> to vector<128xf32>
    %738 = vector.shape_cast %737 : vector<128xf32> to vector<1x128xf32>
    %739 = vector.broadcast %738 : vector<1x128xf32> to vector<16x128xf32>
    %740 = arith.subf %739, %2 : vector<16x128xf32>
    %741 = vector.extract_strided_slice %6 {offsets = [25, 0], sizes = [1, 128], strides = [1, 1]} : vector<27x128xf32> to vector<1x128xf32>
    %742 = vector.shape_cast %741 : vector<1x128xf32> to vector<128xf32>
    %743 = vector.shape_cast %742 : vector<128xf32> to vector<1x128xf32>
    %744 = vector.broadcast %743 : vector<1x128xf32> to vector<16x128xf32>
    %745 = arith.mulf %740, %744 : vector<16x128xf32>
    %746 = arith.mulf %745, %563 : vector<16x128xf32>
    %747 = arith.addf %735, %746 : vector<16x128xf32>
    %748 = vector.extract_strided_slice %3 {offsets = [7, 0], sizes = [1, 128], strides = [1, 1]} : vector<12x128xf32> to vector<1x128xf32>
    %749 = vector.shape_cast %748 : vector<1x128xf32> to vector<128xf32>
    %750 = vector.shape_cast %749 : vector<128xf32> to vector<1x128xf32>
    %751 = vector.broadcast %750 : vector<1x128xf32> to vector<16x128xf32>
    %752 = arith.subf %2, %751 : vector<16x128xf32>
    %753 = vector.extract_strided_slice %5 {offsets = [26, 0], sizes = [1, 128], strides = [1, 1]} : vector<27x128xf32> to vector<1x128xf32>
    %754 = vector.shape_cast %753 : vector<1x128xf32> to vector<128xf32>
    %755 = vector.shape_cast %754 : vector<128xf32> to vector<1x128xf32>
    %756 = vector.broadcast %755 : vector<1x128xf32> to vector<16x128xf32>
    %757 = arith.mulf %752, %756 : vector<16x128xf32>
    %758 = arith.mulf %757, %563 : vector<16x128xf32>
    %759 = vector.extract_strided_slice %3 {offsets = [11, 0], sizes = [1, 128], strides = [1, 1]} : vector<12x128xf32> to vector<1x128xf32>
    %760 = vector.shape_cast %759 : vector<1x128xf32> to vector<128xf32>
    %761 = vector.shape_cast %760 : vector<128xf32> to vector<1x128xf32>
    %762 = vector.broadcast %761 : vector<1x128xf32> to vector<16x128xf32>
    %763 = arith.subf %762, %2 : vector<16x128xf32>
    %764 = vector.extract_strided_slice %6 {offsets = [26, 0], sizes = [1, 128], strides = [1, 1]} : vector<27x128xf32> to vector<1x128xf32>
    %765 = vector.shape_cast %764 : vector<1x128xf32> to vector<128xf32>
    %766 = vector.shape_cast %765 : vector<128xf32> to vector<1x128xf32>
    %767 = vector.broadcast %766 : vector<1x128xf32> to vector<16x128xf32>
    %768 = arith.mulf %763, %767 : vector<16x128xf32>
    %769 = arith.mulf %768, %586 : vector<16x128xf32>
    %770 = arith.addf %758, %769 : vector<16x128xf32>
    %771 = vector.extract_strided_slice %4 {offsets = [0, 0], sizes = [1, 128], strides = [1, 1]} : vector<8x128xf32> to vector<1x128xf32>
    %772 = vector.shape_cast %771 : vector<1x128xf32> to vector<128xf32>
    %773 = vector.shape_cast %772 : vector<128xf32> to vector<1x128xf32>
    %774 = vector.broadcast %773 : vector<1x128xf32> to vector<16x128xf32>
    %775 = arith.mulf %774, %609 : vector<16x128xf32>
    %776 = vector.extract_strided_slice %4 {offsets = [1, 0], sizes = [1, 128], strides = [1, 1]} : vector<8x128xf32> to vector<1x128xf32>
    %777 = vector.shape_cast %776 : vector<1x128xf32> to vector<128xf32>
    %778 = vector.shape_cast %777 : vector<128xf32> to vector<1x128xf32>
    %779 = vector.broadcast %778 : vector<1x128xf32> to vector<16x128xf32>
    %780 = arith.mulf %779, %632 : vector<16x128xf32>
    %781 = arith.addf %775, %780 : vector<16x128xf32>
    %782 = vector.extract_strided_slice %4 {offsets = [2, 0], sizes = [1, 128], strides = [1, 1]} : vector<8x128xf32> to vector<1x128xf32>
    %783 = vector.shape_cast %782 : vector<1x128xf32> to vector<128xf32>
    %784 = vector.shape_cast %783 : vector<128xf32> to vector<1x128xf32>
    %785 = vector.broadcast %784 : vector<1x128xf32> to vector<16x128xf32>
    %786 = arith.mulf %785, %655 : vector<16x128xf32>
    %787 = arith.addf %781, %786 : vector<16x128xf32>
    %788 = vector.extract_strided_slice %4 {offsets = [3, 0], sizes = [1, 128], strides = [1, 1]} : vector<8x128xf32> to vector<1x128xf32>
    %789 = vector.shape_cast %788 : vector<1x128xf32> to vector<128xf32>
    %790 = vector.shape_cast %789 : vector<128xf32> to vector<1x128xf32>
    %791 = vector.broadcast %790 : vector<1x128xf32> to vector<16x128xf32>
    %792 = arith.mulf %791, %678 : vector<16x128xf32>
    %793 = arith.addf %787, %792 : vector<16x128xf32>
    %794 = vector.extract_strided_slice %4 {offsets = [4, 0], sizes = [1, 128], strides = [1, 1]} : vector<8x128xf32> to vector<1x128xf32>
    %795 = vector.shape_cast %794 : vector<1x128xf32> to vector<128xf32>
    %796 = vector.shape_cast %795 : vector<128xf32> to vector<1x128xf32>
    %797 = vector.broadcast %796 : vector<1x128xf32> to vector<16x128xf32>
    %798 = arith.mulf %797, %701 : vector<16x128xf32>
    %799 = arith.addf %793, %798 : vector<16x128xf32>
    %800 = vector.extract_strided_slice %4 {offsets = [5, 0], sizes = [1, 128], strides = [1, 1]} : vector<8x128xf32> to vector<1x128xf32>
    %801 = vector.shape_cast %800 : vector<1x128xf32> to vector<128xf32>
    %802 = vector.shape_cast %801 : vector<128xf32> to vector<1x128xf32>
    %803 = vector.broadcast %802 : vector<1x128xf32> to vector<16x128xf32>
    %804 = arith.mulf %803, %724 : vector<16x128xf32>
    %805 = arith.addf %799, %804 : vector<16x128xf32>
    %806 = vector.extract_strided_slice %4 {offsets = [6, 0], sizes = [1, 128], strides = [1, 1]} : vector<8x128xf32> to vector<1x128xf32>
    %807 = vector.shape_cast %806 : vector<1x128xf32> to vector<128xf32>
    %808 = vector.shape_cast %807 : vector<128xf32> to vector<1x128xf32>
    %809 = vector.broadcast %808 : vector<1x128xf32> to vector<16x128xf32>
    %810 = arith.mulf %809, %747 : vector<16x128xf32>
    %811 = arith.addf %805, %810 : vector<16x128xf32>
    %812 = vector.extract_strided_slice %4 {offsets = [7, 0], sizes = [1, 128], strides = [1, 1]} : vector<8x128xf32> to vector<1x128xf32>
    %813 = vector.shape_cast %812 : vector<1x128xf32> to vector<128xf32>
    %814 = vector.shape_cast %813 : vector<128xf32> to vector<1x128xf32>
    %815 = vector.broadcast %814 : vector<1x128xf32> to vector<16x128xf32>
    %816 = arith.mulf %815, %770 : vector<16x128xf32>
    %817 = arith.addf %811, %816 : vector<16x128xf32>
    %cst_11 = arith.constant 5.000000e-01 : f32
    %818 = vector.broadcast %cst_11 : f32 to vector<16x128xf32>
    %819 = arith.mulf %818, %2 : vector<16x128xf32>
    %820 = math.tanh %819 : vector<16x128xf32>
    %cst_12 = arith.constant 5.000000e-01 : f32
    %821 = vector.broadcast %cst_12 : f32 to vector<16x128xf32>
    %822 = arith.mulf %821, %820 : vector<16x128xf32>
    %cst_13 = arith.constant 5.000000e-01 : f32
    %823 = vector.broadcast %cst_13 : f32 to vector<16x128xf32>
    %824 = arith.addf %822, %823 : vector<16x128xf32>
    %825 = arith.mulf %2, %824 : vector<16x128xf32>
    %c0_14 = arith.constant 0 : index
    %c0_15 = arith.constant 0 : index
    %826 = vector.load %arg10[%c0_14, %c0_15] : memref<1x128xf32, #tpu.memory_space<vmem>>, vector<1x128xf32>
    %c0_16 = arith.constant 0 : index
    %c0_17 = arith.constant 0 : index
    %827 = vector.load %arg8[%c0_16, %c0_17] : memref<1x128xf32, #tpu.memory_space<vmem>>, vector<1x128xf32>
    %828 = vector.broadcast %827 : vector<1x128xf32> to vector<16x128xf32>
    %829 = arith.mulf %828, %825 : vector<16x128xf32>
    %c0_18 = arith.constant 0 : index
    %c0_19 = arith.constant 0 : index
    %830 = vector.load %arg9[%c0_18, %c0_19] : memref<1x128xf32, #tpu.memory_space<vmem>>, vector<1x128xf32>
    %831 = vector.broadcast %830 : vector<1x128xf32> to vector<16x128xf32>
    %832 = arith.mulf %831, %817 : vector<16x128xf32>
    %833 = arith.addf %829, %832 : vector<16x128xf32>
    %834 = vector.broadcast %826 : vector<1x128xf32> to vector<16x128xf32>
    %835 = arith.mulf %834, %833 : vector<16x128xf32>
    %c0_20 = arith.constant 0 : index
    %c0_21 = arith.constant 0 : index
    %836 = vector.load %arg12[%c0_20, %c0_21] : memref<16x128xf32, #tpu.memory_space<vmem>>, vector<16x128xf32>
    tpu.vector_store %arg12[%c0_20, %c0_21], %817 {strides = array<i32>} : memref<16x128xf32, #tpu.memory_space<vmem>>, vector<16x128xf32>,
    %c0_22 = arith.constant 0 : index
    %c0_23 = arith.constant 0 : index
    %837 = vector.load %arg13[%c0_22, %c0_23] : memref<16x128xf32, #tpu.memory_space<vmem>>, vector<16x128xf32>
    tpu.vector_store %arg13[%c0_22, %c0_23], %835 {strides = array<i32>} : memref<16x128xf32, #tpu.memory_space<vmem>>, vector<16x128xf32>,
    %c0_i32 = arith.constant 0 : i32
    %838 = arith.cmpi eq, %arg1, %c0_i32 : i32
    %839 = arith.extui %838 : i1 to i32
    %c0_i32_24 = arith.constant 0 : i32
    %840 = arith.cmpi ne, %839, %c0_i32_24 : i32
    scf.if %840 {
      %cst_32 = arith.constant 0.000000e+00 : f32
      %846 = vector.broadcast %cst_32 : f32 to vector<16x128xf32>
      %c0_33 = arith.constant 0 : index
      %c0_34 = arith.constant 0 : index
      %847 = vector.load %arg14[%c0_33, %c0_34] : memref<16x128xf32, #tpu.memory_space<vmem>>, vector<16x128xf32>
      tpu.vector_store %arg14[%c0_33, %c0_34], %846 {strides = array<i32>} : memref<16x128xf32, #tpu.memory_space<vmem>>, vector<16x128xf32>,
    } else {
    }
    %c0_25 = arith.constant 0 : index
    %c0_26 = arith.constant 0 : index
    %841 = vector.load %arg14[%c0_25, %c0_26] : memref<16x128xf32, #tpu.memory_space<vmem>>, vector<16x128xf32>
    %c0_27 = arith.constant 0 : index
    %c0_28 = arith.constant 0 : index
    %842 = vector.load %arg11[%c0_27, %c0_28] : memref<128x128xf32, #tpu.memory_space<vmem>>, vector<128x128xf32>
    %cst_29 = arith.constant dense<0.000000e+00> : vector<16x128xf32>
    %843 = tpu.matmul %835, %842, %cst_29 {dimension_numbers = #tpu.dot_dimension_numbers<[1], [0], [0], [1], [0, 0, 1, 1], [], []>} : vector<16x128xf32>, vector<128x128xf32>, vector<16x128xf32> -> vector<16x128xf32>
    %844 = arith.addf %841, %843 : vector<16x128xf32>
    %c0_30 = arith.constant 0 : index
    %c0_31 = arith.constant 0 : index
    %845 = vector.load %arg14[%c0_30, %c0_31] : memref<16x128xf32, #tpu.memory_space<vmem>>, vector<16x128xf32>
    tpu.vector_store %arg14[%c0_30, %c0_31], %844 {strides = array<i32>} : memref<16x128xf32, #tpu.memory_space<vmem>>, vector<16x128xf32>,
    return
  }
  func.func @transform_0(%arg0: i32, %arg1: i32) -> (i32, i32) {
    %c0_i32 = arith.constant 0 : i32
    %c0_i32_0 = arith.constant 0 : i32
    return %arg0, %c0_i32 : i32, i32
  }
  func.func @transform_1(%arg0: i32, %arg1: i32) -> (i32, i32) {
    %c0_i32 = arith.constant 0 : i32
    %c0_i32_0 = arith.constant 0 : i32
    return %c0_i32, %arg1 : i32, i32
  }
  func.func @transform_2(%arg0: i32, %arg1: i32) -> (i32, i32) {
    %c0_i32 = arith.constant 0 : i32
    %c0_i32_0 = arith.constant 0 : i32
    return %c0_i32, %arg1 : i32, i32
  }
  func.func @transform_3(%arg0: i32, %arg1: i32) -> (i32, i32) {
    %c0_i32 = arith.constant 0 : i32
    %c0_i32_0 = arith.constant 0 : i32
    return %c0_i32, %arg1 : i32, i32
  }
  func.func @transform_4(%arg0: i32, %arg1: i32) -> (i32, i32) {
    %c0_i32 = arith.constant 0 : i32
    %c0_i32_0 = arith.constant 0 : i32
    return %c0_i32, %arg1 : i32, i32
  }
  func.func @transform_5(%arg0: i32, %arg1: i32) -> (i32, i32) {
    %c0_i32 = arith.constant 0 : i32
    %c0_i32_0 = arith.constant 0 : i32
    return %c0_i32, %arg1 : i32, i32
  }
  func.func @transform_6(%arg0: i32, %arg1: i32) -> (i32, i32) {
    %c0_i32 = arith.constant 0 : i32
    %c0_i32_0 = arith.constant 0 : i32
    return %c0_i32, %arg1 : i32, i32
  }
  func.func @transform_7(%arg0: i32, %arg1: i32) -> (i32, i32) {
    %c0_i32 = arith.constant 0 : i32
    %c0_i32_0 = arith.constant 0 : i32
    return %c0_i32, %arg1 : i32, i32
  }
  func.func @transform_8(%arg0: i32, %arg1: i32) -> (i32, i32) {
    %c0_i32 = arith.constant 0 : i32
    %c0_i32_0 = arith.constant 0 : i32
    return %c0_i32, %arg1 : i32, i32
  }
  func.func @transform_9(%arg0: i32, %arg1: i32) -> (i32, i32) {
    %c0_i32 = arith.constant 0 : i32
    %c0_i32_0 = arith.constant 0 : i32
    return %arg1, %c0_i32 : i32, i32
  }
  func.func @transform_10(%arg0: i32, %arg1: i32) -> (i32, i32) {
    %c0_i32 = arith.constant 0 : i32
    return %arg0, %arg1 : i32, i32
  }
  func.func @transform_11(%arg0: i32, %arg1: i32) -> (i32, i32) {
    %c0_i32 = arith.constant 0 : i32
    return %arg0, %arg1 : i32, i32
  }
  func.func @transform_12(%arg0: i32, %arg1: i32) -> (i32, i32) {
    %c0_i32 = arith.constant 0 : i32
    %c0_i32_0 = arith.constant 0 : i32
    return %arg0, %c0_i32 : i32, i32
  }
}

</mosaic_0001>

<llo_original>
// kernel: tpu_custom_call.1
$region0: #{tpu_custom_call.1}
  #allocation0 [shape = 'u32[]', space=smem, size = 0x4, offset = 0x4, fixed_abs, tag = 'smem constant byte address 0x4 - core index']
  #allocation1 [shape = 'u32[144,128]{1,0:T(1,128)}', space=vmem, size = 0x12000, scoped, tag = 'internal scratch']
  %s0 = inlined_call_operand.vmem [shape: f32[16,4], index: 0, kind: input, shape index: {}]
  %s1 = inlined_call_operand.hbm [shape: f32[4,128], index: 1, kind: input, shape index: {}]
  %s2 = inlined_call_operand.vmem [shape: f32[12,128], index: 2, kind: input, shape index: {}]
  %s3 = inlined_call_operand.vmem [shape: f32[8,128], index: 3, kind: input, shape index: {}]
  %s4 = inlined_call_operand.hbm [shape: f32[27,128], index: 4, kind: input, shape index: {}]
  %s5 = inlined_call_operand.hbm [shape: f32[27,128], index: 5, kind: input, shape index: {}]
  %s6 = inlined_call_operand.vmem [shape: f32[1,128], index: 6, kind: input, shape index: {}]
  %s7 = inlined_call_operand.vmem [shape: f32[1,128], index: 7, kind: input, shape index: {}]
  %s8 = inlined_call_operand.vmem [shape: f32[1,128], index: 8, kind: input, shape index: {}]
  %s9 = inlined_call_operand.hbm [shape: f32[128,128], index: 9, kind: input, shape index: {}]
  %s10 = inlined_call_operand.hbm [shape: f32[16,128], index: 10, kind: output, shape index: {0}]
  %s11 = inlined_call_operand.hbm [shape: f32[16,128], index: 11, kind: output, shape index: {1}]
  %s12 = inlined_call_operand.hbm [shape: f32[16,128], index: 12, kind: output, shape index: {2}]
  %13 = xla_tuple %s10, %s11, %s12
  %s14 = sld [smem:[#allocation0]]
  $region86: #{tpu_custom_call.1} parent=0
    _
  %s16 = ssub.s32 1, %s14
  %s17 = scalar_select 0, %s16, %s14
  $region1: #{tpu_custom_call.1} parent=0
    #allocation2 [shape = 'u8[2048]{0}', space=vmem, size = 0x800, scoped, tag = 'input window, operand 1, single buffered']
    #allocation3 [shape = 's32[1]{0}', space=sflag, size = 0x4, scoped, tag = 'scoped memory for tpu_custom_call.1']
    #allocation4 [shape = 's32[1]{0}', space=sflag, size = 0x4, scoped, tag = 'scoped memory for tpu_custom_call.1']
    #allocation5 [shape = 'u8[16384]{0}', space=vmem, size = 0x4000, scoped, tag = 'input window, operand 4, single buffered']
    #allocation6 [shape = 's32[1]{0}', space=sflag, size = 0x4, scoped, tag = 'scoped memory for tpu_custom_call.1']
    #allocation7 [shape = 'u8[16384]{0}', space=vmem, size = 0x4000, scoped, tag = 'input window, operand 5, single buffered']
    #allocation8 [shape = 'u8[65536]{0}', space=vmem, size = 0x10000, scoped, tag = 'input window, operand 9, single buffered']
    #allocation9 [shape = 's32[1]{0}', space=sflag, size = 0x4, scoped, tag = 'scoped memory for tpu_custom_call.1']
    #allocation10 [shape = 'u8[8192]{0}', space=vmem, size = 0x2000, scoped, tag = 'output window, operand 0, single buffered']
    #allocation11 [shape = 'u8[8192]{0}', space=vmem, size = 0x2000, scoped, tag = 'output window, operand 1, single buffered']
    #allocation12 [shape = 's32[1]{0}', space=sflag, size = 0x4, scoped, tag = 'scoped memory for tpu_custom_call.1']
    #allocation13 [shape = 'u8[8192]{0}', space=vmem, size = 0x2000, scoped, tag = 'output window, operand 2, single buffered']
    %18 = vsyncpa [#allocation3], 0
    %19 = vsyncpa [#allocation6], 0
    %20 = vsyncpa [#allocation9], 0
    %21 = vsyncpa [#allocation4], 0
    %22 = vsyncpa [#allocation12], 0
    // Predicated region
    $region2: #{tpu_custom_call.1} parent=1 // pred_check
      _
    $region3: #{tpu_custom_call.1} parent=1 // pred_check_branch
      %24 = sbr.rel (0) target = $region5
    $region4: #{tpu_custom_call.1} parent=1 // pred_region
      _
    $region5: #{tpu_custom_call.1} parent=1 // pred_fallthru
      _
    // Predicated region
    $region6: #{tpu_custom_call.1} parent=1 // pred_check
      _
    $region7: #{tpu_custom_call.1} parent=1 // pred_check_branch
      %26 = sbr.rel (0) target = $region9
    $region8: #{tpu_custom_call.1} parent=1 // pred_region
      %s28 = ssub.s32 64, 64
      %29 = vsyncadd [#allocation3], %s28
      %s31 = sshll.u32 [#allocation2], 4
      %s32 = int_to_ptr.vmem [resolvable:$true] %s31
      %34 = dma.hbm_to_vmem [thread:$0]  %s1, 64, %s32, [#allocation3]
    $region9: #{tpu_custom_call.1} parent=1 // pred_fallthru
      _
    // Predicated region
    $region10: #{tpu_custom_call.1} parent=1 // pred_check
      _
    $region11: #{tpu_custom_call.1} parent=1 // pred_check_branch
      %36 = sbr.rel (0) target = $region13
    $region12: #{tpu_custom_call.1} parent=1 // pred_region
      _
    $region13: #{tpu_custom_call.1} parent=1 // pred_fallthru
      _
    // Predicated region
    $region14: #{tpu_custom_call.1} parent=1 // pred_check
      _
    $region15: #{tpu_custom_call.1} parent=1 // pred_check_branch
      %38 = sbr.rel (0) target = $region17
    $region16: #{tpu_custom_call.1} parent=1 // pred_region
      _
    $region17: #{tpu_custom_call.1} parent=1 // pred_fallthru
      _
    // Predicated region
    $region18: #{tpu_custom_call.1} parent=1 // pred_check
      _
    $region19: #{tpu_custom_call.1} parent=1 // pred_check_branch
      %40 = sbr.rel (0) target = $region21
    $region20: #{tpu_custom_call.1} parent=1 // pred_region
      %s42 = ssub.s32 512, 512
      %43 = vsyncadd [#allocation6], %s42
      %s44 = sshll.u32 [#allocation5], 4
      %s45 = int_to_ptr.vmem [resolvable:$true] %s44
      %50 = dma.hbm_to_vmem [thread:$0]  %s4, 512, %s45, [#allocation6], 128, 128, 8
    $region21: #{tpu_custom_call.1} parent=1 // pred_fallthru
      _
    // Predicated region
    $region22: #{tpu_custom_call.1} parent=1 // pred_check
      _
    $region23: #{tpu_custom_call.1} parent=1 // pred_check_branch
      %52 = sbr.rel (0) target = $region25
    $region24: #{tpu_custom_call.1} parent=1 // pred_region
      %s54 = ssub.s32 512, 512
      %55 = vsyncadd [#allocation6], %s54
      %s56 = sshll.u32 [#allocation7], 4
      %s57 = int_to_ptr.vmem [resolvable:$true] %s56
      %62 = dma.hbm_to_vmem [thread:$0]  %s5, 512, %s57, [#allocation6], 128, 128, 8
    $region25: #{tpu_custom_call.1} parent=1 // pred_fallthru
      _
    // Predicated region
    $region26: #{tpu_custom_call.1} parent=1 // pred_check
      _
    $region27: #{tpu_custom_call.1} parent=1 // pred_check_branch
      %64 = sbr.rel (0) target = $region29
    $region28: #{tpu_custom_call.1} parent=1 // pred_region
      _
    $region29: #{tpu_custom_call.1} parent=1 // pred_fallthru
      _
    // Predicated region
    $region30: #{tpu_custom_call.1} parent=1 // pred_check
      _
    $region31: #{tpu_custom_call.1} parent=1 // pred_check_branch
      %66 = sbr.rel (0) target = $region33
    $region32: #{tpu_custom_call.1} parent=1 // pred_region
      _
    $region33: #{tpu_custom_call.1} parent=1 // pred_fallthru
      _
    // Predicated region
    $region34: #{tpu_custom_call.1} parent=1 // pred_check
      _
    $region35: #{tpu_custom_call.1} parent=1 // pred_check_branch
      %68 = sbr.rel (0) target = $region37
    $region36: #{tpu_custom_call.1} parent=1 // pred_region
      _
    $region37: #{tpu_custom_call.1} parent=1 // pred_fallthru
      _
    // Predicated region
    $region38: #{tpu_custom_call.1} parent=1 // pred_check
      _
    $region39: #{tpu_custom_call.1} parent=1 // pred_check_branch
      %70 = sbr.rel (0) target = $region41
    $region40: #{tpu_custom_call.1} parent=1 // pred_region
      %s72 = ssub.s32 2048, 2048
      %73 = vsyncadd [#allocation9], %s72
      %s74 = sshll.u32 [#allocation8], 4
      %s75 = int_to_ptr.vmem [resolvable:$true] %s74
      %80 = dma.hbm_to_vmem [thread:$0]  %s9, 2048, %s75, [#allocation9], 128, 128, 8
    $region41: #{tpu_custom_call.1} parent=1 // pred_fallthru
      _
    // Predicated region
    $region42: #{tpu_custom_call.1} parent=1 // pred_check
      _
    $region43: #{tpu_custom_call.1} parent=1 // pred_check_branch
      %82 = sbr.rel (0) target = $region45
    $region44: #{tpu_custom_call.1} parent=1 // pred_region
      %83 = dma.done [#allocation3], 64
    $region45: #{tpu_custom_call.1} parent=1 // pred_fallthru
      _
    // Predicated region
    $region46: #{tpu_custom_call.1} parent=1 // pred_check
      _
    $region47: #{tpu_custom_call.1} parent=1 // pred_check_branch
      %85 = sbr.rel (0) target = $region49
    $region48: #{tpu_custom_call.1} parent=1 // pred_region
      %86 = dma.done [#allocation6], 512
    $region49: #{tpu_custom_call.1} parent=1 // pred_fallthru
      _
    // Predicated region
    $region50: #{tpu_custom_call.1} parent=1 // pred_check
      _
    $region51: #{tpu_custom_call.1} parent=1 // pred_check_branch
      %88 = sbr.rel (0) target = $region53
    $region52: #{tpu_custom_call.1} parent=1 // pred_region
      %89 = dma.done [#allocation6], 512
    $region53: #{tpu_custom_call.1} parent=1 // pred_fallthru
      _
    // Predicated region
    $region54: #{tpu_custom_call.1} parent=1 // pred_check
      _
    $region55: #{tpu_custom_call.1} parent=1 // pred_check_branch
      %91 = sbr.rel (0) target = $region57
    $region56: #{tpu_custom_call.1} parent=1 // pred_region
      %92 = dma.done [#allocation9], 2048
    $region57: #{tpu_custom_call.1} parent=1 // pred_fallthru
      _
    %v93 = vld [vmem:[%s0] sm:$0xff]
    %v94 = vld [vmem:[%s0 + $0x8] sm:$0xff]
    %v95 = vld [vmem:[#allocation2] sm:$0xf]
    %vm96 = vcmask 31744
    %v98 = vsel %vm96, %v93, 0
    %v101 = vsel %vm96, %v94, 0
    %vm103 = vcmask 1043456
    %v105 = vsel %vm103, %v95, 0
    %107 = vmatprep.subr.mxu0 0.0
    %108 = vmatpush1.msra.mxu0 0.0
    %109 = vmatprep.subr.mxu0 0.0
    %110 = vmatpush1.msra.mxu0 0.0
    %111 = vmatprep.subr.mxu0 0.0
    %112 = vmatpush1.msra.mxu0 0.0
    %113 = vmatprep.subr.mxu0 0.0
    %114 = vmatpush1.msra.mxu0 0.0
    %115 = vmatprep.subr.mxu0 0.0
    %116 = vmatpush1.msra.mxu0 0.0
    %117 = vmatprep.subr.mxu0 0.0
    %118 = vmatpush1.msra.mxu0 0.0
    %119 = vmatprep.subr.mxu0 0.0
    %120 = vmatpush1.msra.mxu0 0.0
    %121 = vmatprep.subr.mxu0 0.0
    %122 = vmatpush1.msra.mxu0 0.0
    %123 = vmatprep.subr.mxu0 0.0
    %124 = vmatpush1.msra.mxu0 0.0
    %125 = vmatprep.subr.mxu0 0.0
    %126 = vmatpush1.msra.mxu0 0.0
    %127 = vmatprep.subr.mxu0 0.0
    %128 = vmatpush1.msra.mxu0 0.0
    %129 = vmatprep.subr.mxu0 0.0
    %130 = vmatpush1.msra.mxu0 0.0
    %131 = vmatprep.subr.mxu0 0.0
    %132 = vmatpush1.msra.mxu0 0.0
    %133 = vmatprep.subr.mxu0 0.0
    %134 = vmatpush1.msra.mxu0 0.0
    %135 = vmatprep.subr.mxu0 0.0
    %136 = vmatpush1.msra.mxu0 0.0
    %137 = vmatprep.subr.mxu0 0.0
    %138 = vmatpush1.msra.mxu0 %v105
    %139 = vmatprep.subr.mxu0 0.0
    %140 = vmatpush2.msra.mxu0 0.0
    %141 = vmatprep.subr.mxu0 0.0
    %142 = vmatpush2.msra.mxu0 0.0
    %143 = vmatprep.subr.mxu0 0.0
    %144 = vmatpush2.msra.mxu0 0.0
    %145 = vmatprep.subr.mxu0 0.0
    %146 = vmatpush2.msra.mxu0 0.0
    %147 = vmatprep.subr.mxu0 0.0
    %148 = vmatpush2.msra.mxu0 0.0
    %149 = vmatprep.subr.mxu0 0.0
    %150 = vmatpush2.msra.mxu0 0.0
    %151 = vmatprep.subr.mxu0 0.0
    %152 = vmatpush2.msra.mxu0 0.0
    %153 = vmatprep.subr.mxu0 0.0
    %154 = vmatpush2.msra.mxu0 0.0
    %155 = vmatprep.subr.mxu0 0.0
    %156 = vmatpush2.msra.mxu0 0.0
    %157 = vmatprep.subr.mxu0 0.0
    %158 = vmatpush2.msra.mxu0 0.0
    %159 = vmatprep.subr.mxu0 0.0
    %160 = vmatpush2.msra.mxu0 0.0
    %161 = vmatprep.subr.mxu0 0.0
    %162 = vmatpush2.msra.mxu0 0.0
    %163 = vmatprep.subr.mxu0 0.0
    %164 = vmatpush2.msra.mxu0 0.0
    %165 = vmatprep.subr.mxu0 0.0
    %166 = vmatpush2.msra.mxu0 0.0
    %167 = vmatprep.subr.mxu0 0.0
    %168 = vmatpush2.msra.mxu0 0.0
    %169 = vmatprep.subr.mxu0 0.0
    %170 = vmatpush2.msra.mxu0 0.0
    %171 = vmatprep.mubr.f32.mxu0 0.0
    %172 = vmatmul.mubr.f32.gmra.mxu0 %v98
    %v173 = vpop.f32.mrf.mxu0
    %v174 = vadd.f32 0.0, %v173
    %v175 = vpop.f32.mrf.mxu0
    %176 = vmatprep.mubr.f32.mxu0 0.0
    %177 = vmatmul.mubr.f32.gmra.mxu0 %v101
    %v178 = vpop.f32.mrf.mxu0
    %v179 = vadd.f32 0.0, %v178
    %v180 = vpop.f32.mrf.mxu0
    %181 = vdwg.mxu0
    %v182 = vld [vmem:[%s2] sm:$0xff]
    %v183 = vld [vmem:[%s2 + $0x8] sm:$0xf]
    %v184 = vld [vmem:[%s3] sm:$0xff]
    %v185 = vld [vmem:[#allocation5] sm:$0xff]
    %v186 = vld [vmem:[#allocation5 + $0x8] sm:$0xff]
    %v187 = vld [vmem:[#allocation5 + $0x10] sm:$0xff]
    %v188 = vld [vmem:[#allocation5 + $0x18] sm:$0x7]
    %v189 = vld [vmem:[#allocation7] sm:$0xff]
    %v190 = vld [vmem:[#allocation7 + $0x8] sm:$0xff]
    %v191 = vld [vmem:[#allocation7 + $0x10] sm:$0xff]
    %v192 = vld [vmem:[#allocation7 + $0x18] sm:$0x7]
    %v193 = vlaneseq
    %v194 = vshrl.u32 %v193, 7
    %v195 = vsub.s32 0, %v194
    %v196 = vrot.slane %v182, %v195
    %vm197 = vcmp.ge.f32.partialorder %v174, %v196
    %vm198 = vcmp.ge.f32.partialorder %v179, %v196
    %v199 = vlaneseq
    %v200 = vshrl.u32 %v199, 7
    %v201 = vsub.s32 1, %v200
    %v202 = vrot.slane %v182, %v201
    %vm203 = vcmp.lt.f32.partialorder %v174, %v202
    %vm204 = vcmp.lt.f32.partialorder %v179, %v202
    %vm205 = vmand %vm197, %vm203
    %vm206 = vmand %vm198, %vm204
    %v207 = vsel %vm205, 1, 0
    %v208 = vsel %vm206, 1, 0
    %v209 = vcvt.s32.f32 %v207
    %v210 = vcvt.s32.f32 %v208
    %vm211 = vcmp.ge.f32.partialorder %v174, %v202
    %vm212 = vcmp.ge.f32.partialorder %v179, %v202
    %v213 = vlaneseq
    %v214 = vshrl.u32 %v213, 7
    %v215 = vsub.s32 2, %v214
    %v216 = vrot.slane %v182, %v215
    %vm217 = vcmp.lt.f32.partialorder %v174, %v216
    %vm218 = vcmp.lt.f32.partialorder %v179, %v216
    %vm219 = vmand %vm211, %vm217
    %vm220 = vmand %vm212, %vm218
    %v221 = vsel %vm219, 1, 0
    %v222 = vsel %vm220, 1, 0
    %v223 = vcvt.s32.f32 %v221
    %v224 = vcvt.s32.f32 %v222
    %vm225 = vcmp.ge.f32.partialorder %v174, %v216
    %vm226 = vcmp.ge.f32.partialorder %v179, %v216
    %v227 = vlaneseq
    %v228 = vshrl.u32 %v227, 7
    %v229 = vsub.s32 3, %v228
    %v230 = vrot.slane %v182, %v229
    %vm231 = vcmp.lt.f32.partialorder %v174, %v230
    %vm232 = vcmp.lt.f32.partialorder %v179, %v230
    %vm233 = vmand %vm225, %vm231
    %vm234 = vmand %vm226, %vm232
    %v235 = vsel %vm233, 1, 0
    %v236 = vsel %vm234, 1, 0
    %v237 = vcvt.s32.f32 %v235
    %v238 = vcvt.s32.f32 %v236
    %vm239 = vcmp.ge.f32.partialorder %v174, %v230
    %vm240 = vcmp.ge.f32.partialorder %v179, %v230
    %v241 = vlaneseq
    %v242 = vshrl.u32 %v241, 7
    %v243 = vsub.s32 4, %v242
    %v244 = vrot.slane %v182, %v243
    %vm245 = vcmp.lt.f32.partialorder %v174, %v244
    %vm246 = vcmp.lt.f32.partialorder %v179, %v244
    %vm247 = vmand %vm239, %vm245
    %vm248 = vmand %vm240, %vm246
    %v249 = vsel %vm247, 1, 0
    %v250 = vsel %vm248, 1, 0
    %v251 = vcvt.s32.f32 %v249
    %v252 = vcvt.s32.f32 %v250
    %vm253 = vcmp.ge.f32.partialorder %v174, %v244
    %vm254 = vcmp.ge.f32.partialorder %v179, %v244
    %v255 = vlaneseq
    %v256 = vshrl.u32 %v255, 7
    %v257 = vsub.s32 5, %v256
    %v258 = vrot.slane %v182, %v257
    %vm259 = vcmp.lt.f32.partialorder %v174, %v258
    %vm260 = vcmp.lt.f32.partialorder %v179, %v258
    %vm261 = vmand %vm253, %vm259
    %vm262 = vmand %vm254, %vm260
    %v263 = vsel %vm261, 1, 0
    %v264 = vsel %vm262, 1, 0
    %v265 = vcvt.s32.f32 %v263
    %v266 = vcvt.s32.f32 %v264
    %vm267 = vcmp.ge.f32.partialorder %v174, %v258
    %vm268 = vcmp.ge.f32.partialorder %v179, %v258
    %v269 = vlaneseq
    %v270 = vshrl.u32 %v269, 7
    %v271 = vsub.s32 6, %v270
    %v272 = vrot.slane %v182, %v271
    %vm273 = vcmp.lt.f32.partialorder %v174, %v272
    %vm274 = vcmp.lt.f32.partialorder %v179, %v272
    %vm275 = vmand %vm267, %vm273
    %vm276 = vmand %vm268, %vm274
    %v277 = vsel %vm275, 1, 0
    %v278 = vsel %vm276, 1, 0
    %v279 = vcvt.s32.f32 %v277
    %v280 = vcvt.s32.f32 %v278
    %vm281 = vcmp.ge.f32.partialorder %v174, %v272
    %vm282 = vcmp.ge.f32.partialorder %v179, %v272
    %v283 = vlaneseq
    %v284 = vshrl.u32 %v283, 7
    %v285 = vsub.s32 7, %v284
    %v286 = vrot.slane %v182, %v285
    %vm287 = vcmp.lt.f32.partialorder %v174, %v286
    %vm288 = vcmp.lt.f32.partialorder %v179, %v286
    %vm289 = vmand %vm281, %vm287
    %vm290 = vmand %vm282, %vm288
    %v291 = vsel %vm289, 1, 0
    %v292 = vsel %vm290, 1, 0
    %v293 = vcvt.s32.f32 %v291
    %v294 = vcvt.s32.f32 %v292
    %vm295 = vcmp.ge.f32.partialorder %v174, %v286
    %vm296 = vcmp.ge.f32.partialorder %v179, %v286
    %v297 = vlaneseq
    %v298 = vshrl.u32 %v297, 7
    %v299 = vsub.s32 0, %v298
    %v300 = vrot.slane %v183, %v299
    %vm301 = vcmp.lt.f32.partialorder %v174, %v300
    %vm302 = vcmp.lt.f32.partialorder %v179, %v300
    %vm303 = vmand %vm295, %vm301
    %vm304 = vmand %vm296, %vm302
    %v305 = vsel %vm303, 1, 0
    %v306 = vsel %vm304, 1, 0
    %v307 = vcvt.s32.f32 %v305
    %v308 = vcvt.s32.f32 %v306
    %vm309 = vcmp.ge.f32.partialorder %v174, %v300
    %vm310 = vcmp.ge.f32.partialorder %v179, %v300
    %v311 = vlaneseq
    %v312 = vshrl.u32 %v311, 7
    %v313 = vsub.s32 1, %v312
    %v314 = vrot.slane %v183, %v313
    %vm315 = vcmp.lt.f32.partialorder %v174, %v314
    %vm316 = vcmp.lt.f32.partialorder %v179, %v314
    %vm317 = vmand %vm309, %vm315
    %vm318 = vmand %vm310, %vm316
    %v319 = vsel %vm317, 1, 0
    %v320 = vsel %vm318, 1, 0
    %v321 = vcvt.s32.f32 %v319
    %v322 = vcvt.s32.f32 %v320
    %vm323 = vcmp.ge.f32.partialorder %v174, %v314
    %vm324 = vcmp.ge.f32.partialorder %v179, %v314
    %v325 = vlaneseq
    %v326 = vshrl.u32 %v325, 7
    %v327 = vsub.s32 2, %v326
    %v328 = vrot.slane %v183, %v327
    %vm329 = vcmp.lt.f32.partialorder %v174, %v328
    %vm330 = vcmp.lt.f32.partialorder %v179, %v328
    %vm331 = vmand %vm323, %vm329
    %vm332 = vmand %vm324, %vm330
    %v333 = vsel %vm331, 1, 0
    %v334 = vsel %vm332, 1, 0
    %v335 = vcvt.s32.f32 %v333
    %v336 = vcvt.s32.f32 %v334
    %vm337 = vcmp.ge.f32.partialorder %v174, %v328
    %vm338 = vcmp.ge.f32.partialorder %v179, %v328
    %v339 = vlaneseq
    %v340 = vshrl.u32 %v339, 7
    %v341 = vsub.s32 3, %v340
    %v342 = vrot.slane %v183, %v341
    %vm343 = vcmp.lt.f32.partialorder %v174, %v342
    %vm344 = vcmp.lt.f32.partialorder %v179, %v342
    %vm345 = vmand %vm337, %vm343
    %vm346 = vmand %vm338, %vm344
    %v347 = vsel %vm345, 1, 0
    %v348 = vsel %vm346, 1, 0
    %v349 = vcvt.s32.f32 %v347
    %v350 = vcvt.s32.f32 %v348
    %v351 = vsub.f32 %v174, %v196
    %v352 = vsub.f32 %v179, %v196
    %v353 = vlaneseq
    %v354 = vshrl.u32 %v353, 7
    %v355 = vsub.s32 0, %v354
    %v356 = vrot.slane %v185, %v355
    %v357 = vmul.f32 %v351, %v356
    %v358 = vmul.f32 %v352, %v356
    %v359 = vmul.f32 %v357, %v209
    %v360 = vmul.f32 %v358, %v210
    %v361 = vsub.f32 %v216, %v174
    %v362 = vsub.f32 %v216, %v179
    %v363 = vlaneseq
    %v364 = vshrl.u32 %v363, 7
    %v365 = vsub.s32 0, %v364
    %v366 = vrot.slane %v189, %v365
    %v367 = vmul.f32 %v361, %v366
    %v368 = vmul.f32 %v362, %v366
    %v369 = vmul.f32 %v367, %v223
    %v370 = vmul.f32 %v368, %v224
    %v371 = vadd.f32 %v359, %v369
    %v372 = vadd.f32 %v360, %v370
    %v373 = vsub.f32 %v174, %v202
    %v374 = vsub.f32 %v179, %v202
    %v375 = vlaneseq
    %v376 = vshrl.u32 %v375, 7
    %v377 = vsub.s32 1, %v376
    %v378 = vrot.slane %v185, %v377
    %v379 = vmul.f32 %v373, %v378
    %v380 = vmul.f32 %v374, %v378
    %v381 = vmul.f32 %v379, %v223
    %v382 = vmul.f32 %v380, %v224
    %v383 = vsub.f32 %v230, %v174
    %v384 = vsub.f32 %v230, %v179
    %v385 = vlaneseq
    %v386 = vshrl.u32 %v385, 7
    %v387 = vsub.s32 1, %v386
    %v388 = vrot.slane %v189, %v387
    %v389 = vmul.f32 %v383, %v388
    %v390 = vmul.f32 %v384, %v388
    %v391 = vmul.f32 %v389, %v237
    %v392 = vmul.f32 %v390, %v238
    %v393 = vadd.f32 %v381, %v391
    %v394 = vadd.f32 %v382, %v392
    %v395 = vsub.f32 %v174, %v216
    %v396 = vsub.f32 %v179, %v216
    %v397 = vlaneseq
    %v398 = vshrl.u32 %v397, 7
    %v399 = vsub.s32 2, %v398
    %v400 = vrot.slane %v185, %v399
    %v401 = vmul.f32 %v395, %v400
    %v402 = vmul.f32 %v396, %v400
    %v403 = vmul.f32 %v401, %v237
    %v404 = vmul.f32 %v402, %v238
    %v405 = vsub.f32 %v244, %v174
    %v406 = vsub.f32 %v244, %v179
    %v407 = vlaneseq
    %v408 = vshrl.u32 %v407, 7
    %v409 = vsub.s32 2, %v408
    %v410 = vrot.slane %v189, %v409
    %v411 = vmul.f32 %v405, %v410
    %v412 = vmul.f32 %v406, %v410
    %v413 = vmul.f32 %v411, %v251
    %v414 = vmul.f32 %v412, %v252
    %v415 = vadd.f32 %v403, %v413
    %v416 = vadd.f32 %v404, %v414
    %v417 = vsub.f32 %v174, %v230
    %v418 = vsub.f32 %v179, %v230
    %v419 = vlaneseq
    %v420 = vshrl.u32 %v419, 7
    %v421 = vsub.s32 3, %v420
    %v422 = vrot.slane %v185, %v421
    %v423 = vmul.f32 %v417, %v422
    %v424 = vmul.f32 %v418, %v422
    %v425 = vmul.f32 %v423, %v251
    %v426 = vmul.f32 %v424, %v252
    %v427 = vsub.f32 %v258, %v174
    %v428 = vsub.f32 %v258, %v179
    %v429 = vlaneseq
    %v430 = vshrl.u32 %v429, 7
    %v431 = vsub.s32 3, %v430
    %v432 = vrot.slane %v189, %v431
    %v433 = vmul.f32 %v427, %v432
    %v434 = vmul.f32 %v428, %v432
    %v435 = vmul.f32 %v433, %v265
    %v436 = vmul.f32 %v434, %v266
    %v437 = vadd.f32 %v425, %v435
    %v438 = vadd.f32 %v426, %v436
    %v439 = vsub.f32 %v174, %v244
    %v440 = vsub.f32 %v179, %v244
    %v441 = vlaneseq
    %v442 = vshrl.u32 %v441, 7
    %v443 = vsub.s32 4, %v442
    %v444 = vrot.slane %v185, %v443
    %v445 = vmul.f32 %v439, %v444
    %v446 = vmul.f32 %v440, %v444
    %v447 = vmul.f32 %v445, %v265
    %v448 = vmul.f32 %v446, %v266
    %v449 = vsub.f32 %v272, %v174
    %v450 = vsub.f32 %v272, %v179
    %v451 = vlaneseq
    %v452 = vshrl.u32 %v451, 7
    %v453 = vsub.s32 4, %v452
    %v454 = vrot.slane %v189, %v453
    %v455 = vmul.f32 %v449, %v454
    %v456 = vmul.f32 %v450, %v454
    %v457 = vmul.f32 %v455, %v279
    %v458 = vmul.f32 %v456, %v280
    %v459 = vadd.f32 %v447, %v457
    %v460 = vadd.f32 %v448, %v458
    %v461 = vsub.f32 %v174, %v258
    %v462 = vsub.f32 %v179, %v258
    %v463 = vlaneseq
    %v464 = vshrl.u32 %v463, 7
    %v465 = vsub.s32 5, %v464
    %v466 = vrot.slane %v185, %v465
    %v467 = vmul.f32 %v461, %v466
    %v468 = vmul.f32 %v462, %v466
    %v469 = vmul.f32 %v467, %v279
    %v470 = vmul.f32 %v468, %v280
    %v471 = vsub.f32 %v286, %v174
    %v472 = vsub.f32 %v286, %v179
    %v473 = vlaneseq
    %v474 = vshrl.u32 %v473, 7
    %v475 = vsub.s32 5, %v474
    %v476 = vrot.slane %v189, %v475
    %v477 = vmul.f32 %v471, %v476
    %v478 = vmul.f32 %v472, %v476
    %v479 = vmul.f32 %v477, %v293
    %v480 = vmul.f32 %v478, %v294
    %v481 = vadd.f32 %v469, %v479
    %v482 = vadd.f32 %v470, %v480
    %v483 = vsub.f32 %v174, %v272
    %v484 = vsub.f32 %v179, %v272
    %v485 = vlaneseq
    %v486 = vshrl.u32 %v485, 7
    %v487 = vsub.s32 6, %v486
    %v488 = vrot.slane %v185, %v487
    %v489 = vmul.f32 %v483, %v488
    %v490 = vmul.f32 %v484, %v488
    %v491 = vmul.f32 %v489, %v293
    %v492 = vmul.f32 %v490, %v294
    %v493 = vsub.f32 %v300, %v174
    %v494 = vsub.f32 %v300, %v179
    %v495 = vlaneseq
    %v496 = vshrl.u32 %v495, 7
    %v497 = vsub.s32 6, %v496
    %v498 = vrot.slane %v189, %v497
    %v499 = vmul.f32 %v493, %v498
    %v500 = vmul.f32 %v494, %v498
    %v501 = vmul.f32 %v499, %v307
    %v502 = vmul.f32 %v500, %v308
    %v503 = vadd.f32 %v491, %v501
    %v504 = vadd.f32 %v492, %v502
    %v505 = vsub.f32 %v174, %v286
    %v506 = vsub.f32 %v179, %v286
    %v507 = vlaneseq
    %v508 = vshrl.u32 %v507, 7
    %v509 = vsub.s32 7, %v508
    %v510 = vrot.slane %v185, %v509
    %v511 = vmul.f32 %v505, %v510
    %v512 = vmul.f32 %v506, %v510
    %v513 = vmul.f32 %v511, %v307
    %v514 = vmul.f32 %v512, %v308
    %v515 = vsub.f32 %v314, %v174
    %v516 = vsub.f32 %v314, %v179
    %v517 = vlaneseq
    %v518 = vshrl.u32 %v517, 7
    %v519 = vsub.s32 7, %v518
    %v520 = vrot.slane %v189, %v519
    %v521 = vmul.f32 %v515, %v520
    %v522 = vmul.f32 %v516, %v520
    %v523 = vmul.f32 %v521, %v321
    %v524 = vmul.f32 %v522, %v322
    %v525 = vadd.f32 %v513, %v523
    %v526 = vadd.f32 %v514, %v524
    %v527 = vsub.f32 %v174, %v300
    %v528 = vsub.f32 %v179, %v300
    %v529 = vlaneseq
    %v530 = vshrl.u32 %v529, 7
    %v531 = vsub.s32 0, %v530
    %v532 = vrot.slane %v186, %v531
    %v533 = vmul.f32 %v527, %v532
    %v534 = vmul.f32 %v528, %v532
    %v535 = vmul.f32 %v533, %v321
    %v536 = vmul.f32 %v534, %v322
    %v537 = vsub.f32 %v328, %v174
    %v538 = vsub.f32 %v328, %v179
    %v539 = vlaneseq
    %v540 = vshrl.u32 %v539, 7
    %v541 = vsub.s32 0, %v540
    %v542 = vrot.slane %v190, %v541
    %v543 = vmul.f32 %v537, %v542
    %v544 = vmul.f32 %v538, %v542
    %v545 = vmul.f32 %v543, %v335
    %v546 = vmul.f32 %v544, %v336
    %v547 = vadd.f32 %v535, %v545
    %v548 = vadd.f32 %v536, %v546
    %v549 = vsub.f32 %v174, %v314
    %v550 = vsub.f32 %v179, %v314
    %v551 = vlaneseq
    %v552 = vshrl.u32 %v551, 7
    %v553 = vsub.s32 1, %v552
    %v554 = vrot.slane %v186, %v553
    %v555 = vmul.f32 %v549, %v554
    %v556 = vmul.f32 %v550, %v554
    %v557 = vmul.f32 %v555, %v335
    %v558 = vmul.f32 %v556, %v336
    %v559 = vsub.f32 %v342, %v174
    %v560 = vsub.f32 %v342, %v179
    %v561 = vlaneseq
    %v562 = vshrl.u32 %v561, 7
    %v563 = vsub.s32 1, %v562
    %v564 = vrot.slane %v190, %v563
    %v565 = vmul.f32 %v559, %v564
    %v566 = vmul.f32 %v560, %v564
    %v567 = vmul.f32 %v565, %v349
    %v568 = vmul.f32 %v566, %v350
    %v569 = vadd.f32 %v557, %v567
    %v570 = vadd.f32 %v558, %v568
    %v571 = vlaneseq
    %v572 = vshrl.u32 %v571, 7
    %v573 = vsub.s32 2, %v572
    %v574 = vrot.slane %v186, %v573
    %v575 = vmul.f32 %v351, %v574
    %v576 = vmul.f32 %v352, %v574
    %v577 = vmul.f32 %v575, %v371
    %v578 = vmul.f32 %v576, %v372
    %v579 = vlaneseq
    %v580 = vshrl.u32 %v579, 7
    %v581 = vsub.s32 2, %v580
    %v582 = vrot.slane %v190, %v581
    %v583 = vmul.f32 %v383, %v582
    %v584 = vmul.f32 %v384, %v582
    %v585 = vmul.f32 %v583, %v393
    %v586 = vmul.f32 %v584, %v394
    %v587 = vadd.f32 %v577, %v585
    %v588 = vadd.f32 %v578, %v586
    %v589 = vlaneseq
    %v590 = vshrl.u32 %v589, 7
    %v591 = vsub.s32 3, %v590
    %v592 = vrot.slane %v186, %v591
    %v593 = vmul.f32 %v373, %v592
    %v594 = vmul.f32 %v374, %v592
    %v595 = vmul.f32 %v593, %v393
    %v596 = vmul.f32 %v594, %v394
    %v597 = vlaneseq
    %v598 = vshrl.u32 %v597, 7
    %v599 = vsub.s32 3, %v598
    %v600 = vrot.slane %v190, %v599
    %v601 = vmul.f32 %v405, %v600
    %v602 = vmul.f32 %v406, %v600
    %v603 = vmul.f32 %v601, %v415
    %v604 = vmul.f32 %v602, %v416
    %v605 = vadd.f32 %v595, %v603
    %v606 = vadd.f32 %v596, %v604
    %v607 = vlaneseq
    %v608 = vshrl.u32 %v607, 7
    %v609 = vsub.s32 4, %v608
    %v610 = vrot.slane %v186, %v609
    %v611 = vmul.f32 %v395, %v610
    %v612 = vmul.f32 %v396, %v610
    %v613 = vmul.f32 %v611, %v415
    %v614 = vmul.f32 %v612, %v416
    %v615 = vlaneseq
    %v616 = vshrl.u32 %v615, 7
    %v617 = vsub.s32 4, %v616
    %v618 = vrot.slane %v190, %v617
    %v619 = vmul.f32 %v427, %v618
    %v620 = vmul.f32 %v428, %v618
    %v621 = vmul.f32 %v619, %v437
    %v622 = vmul.f32 %v620, %v438
    %v623 = vadd.f32 %v613, %v621
    %v624 = vadd.f32 %v614, %v622
    %v625 = vlaneseq
    %v626 = vshrl.u32 %v625, 7
    %v627 = vsub.s32 5, %v626
    %v628 = vrot.slane %v186, %v627
    %v629 = vmul.f32 %v417, %v628
    %v630 = vmul.f32 %v418, %v628
    %v631 = vmul.f32 %v629, %v437
    %v632 = vmul.f32 %v630, %v438
    %v633 = vlaneseq
    %v634 = vshrl.u32 %v633, 7
    %v635 = vsub.s32 5, %v634
    %v636 = vrot.slane %v190, %v635
    %v637 = vmul.f32 %v449, %v636
    %v638 = vmul.f32 %v450, %v636
    %v639 = vmul.f32 %v637, %v459
    %v640 = vmul.f32 %v638, %v460
    %v641 = vadd.f32 %v631, %v639
    %v642 = vadd.f32 %v632, %v640
    %v643 = vlaneseq
    %v644 = vshrl.u32 %v643, 7
    %v645 = vsub.s32 6, %v644
    %v646 = vrot.slane %v186, %v645
    %v647 = vmul.f32 %v439, %v646
    %v648 = vmul.f32 %v440, %v646
    %v649 = vmul.f32 %v647, %v459
    %v650 = vmul.f32 %v648, %v460
    %v651 = vlaneseq
    %v652 = vshrl.u32 %v651, 7
    %v653 = vsub.s32 6, %v652
    %v654 = vrot.slane %v190, %v653
    %v655 = vmul.f32 %v471, %v654
    %v656 = vmul.f32 %v472, %v654
    %v657 = vmul.f32 %v655, %v481
    %v658 = vmul.f32 %v656, %v482
    %v659 = vadd.f32 %v649, %v657
    %v660 = vadd.f32 %v650, %v658
    %v661 = vlaneseq
    %v662 = vshrl.u32 %v661, 7
    %v663 = vsub.s32 7, %v662
    %v664 = vrot.slane %v186, %v663
    %v665 = vmul.f32 %v461, %v664
    %v666 = vmul.f32 %v462, %v664
    %v667 = vmul.f32 %v665, %v481
    %v668 = vmul.f32 %v666, %v482
    %v669 = vlaneseq
    %v670 = vshrl.u32 %v669, 7
    %v671 = vsub.s32 7, %v670
    %v672 = vrot.slane %v190, %v671
    %v673 = vmul.f32 %v493, %v672
    %v674 = vmul.f32 %v494, %v672
    %v675 = vmul.f32 %v673, %v503
    %v676 = vmul.f32 %v674, %v504
    %v677 = vadd.f32 %v667, %v675
    %v678 = vadd.f32 %v668, %v676
    %v679 = vlaneseq
    %v680 = vshrl.u32 %v679, 7
    %v681 = vsub.s32 0, %v680
    %v682 = vrot.slane %v187, %v681
    %v683 = vmul.f32 %v483, %v682
    %v684 = vmul.f32 %v484, %v682
    %v685 = vmul.f32 %v683, %v503
    %v686 = vmul.f32 %v684, %v504
    %v687 = vlaneseq
    %v688 = vshrl.u32 %v687, 7
    %v689 = vsub.s32 0, %v688
    %v690 = vrot.slane %v191, %v689
    %v691 = vmul.f32 %v515, %v690
    %v692 = vmul.f32 %v516, %v690
    %v693 = vmul.f32 %v691, %v525
    %v694 = vmul.f32 %v692, %v526
    %v695 = vadd.f32 %v685, %v693
    %v696 = vadd.f32 %v686, %v694
    %v697 = vlaneseq
    %v698 = vshrl.u32 %v697, 7
    %v699 = vsub.s32 1, %v698
    %v700 = vrot.slane %v187, %v699
    %v701 = vmul.f32 %v505, %v700
    %v702 = vmul.f32 %v506, %v700
    %v703 = vmul.f32 %v701, %v525
    %v704 = vmul.f32 %v702, %v526
    %v705 = vlaneseq
    %v706 = vshrl.u32 %v705, 7
    %v707 = vsub.s32 1, %v706
    %v708 = vrot.slane %v191, %v707
    %v709 = vmul.f32 %v537, %v708
    %v710 = vmul.f32 %v538, %v708
    %v711 = vmul.f32 %v709, %v547
    %v712 = vmul.f32 %v710, %v548
    %v713 = vadd.f32 %v703, %v711
    %v714 = vadd.f32 %v704, %v712
    %v715 = vlaneseq
    %v716 = vshrl.u32 %v715, 7
    %v717 = vsub.s32 2, %v716
    %v718 = vrot.slane %v187, %v717
    %v719 = vmul.f32 %v527, %v718
    %v720 = vmul.f32 %v528, %v718
    %v721 = vmul.f32 %v719, %v547
    %v722 = vmul.f32 %v720, %v548
    %v723 = vlaneseq
    %v724 = vshrl.u32 %v723, 7
    %v725 = vsub.s32 2, %v724
    %v726 = vrot.slane %v191, %v725
    %v727 = vmul.f32 %v559, %v726
    %v728 = vmul.f32 %v560, %v726
    %v729 = vmul.f32 %v727, %v569
    %v730 = vmul.f32 %v728, %v570
    %v731 = vadd.f32 %v721, %v729
    %v732 = vadd.f32 %v722, %v730
    %v733 = vlaneseq
    %v734 = vshrl.u32 %v733, 7
    %v735 = vsub.s32 3, %v734
    %v736 = vrot.slane %v187, %v735
    %v737 = vmul.f32 %v351, %v736
    %v738 = vmul.f32 %v352, %v736
    %v739 = vmul.f32 %v737, %v587
    %v740 = vmul.f32 %v738, %v588
    %v741 = vlaneseq
    %v742 = vshrl.u32 %v741, 7
    %v743 = vsub.s32 3, %v742
    %v744 = vrot.slane %v191, %v743
    %v745 = vmul.f32 %v405, %v744
    %v746 = vmul.f32 %v406, %v744
    %v747 = vmul.f32 %v745, %v605
    %v748 = vmul.f32 %v746, %v606
    %v749 = vadd.f32 %v739, %v747
    %v750 = vadd.f32 %v740, %v748
    %v751 = vlaneseq
    %v752 = vshrl.u32 %v751, 7
    %v753 = vsub.s32 4, %v752
    %v754 = vrot.slane %v187, %v753
    %v755 = vmul.f32 %v373, %v754
    %v756 = vmul.f32 %v374, %v754
    %v757 = vmul.f32 %v755, %v605
    %v758 = vmul.f32 %v756, %v606
    %v759 = vlaneseq
    %v760 = vshrl.u32 %v759, 7
    %v761 = vsub.s32 4, %v760
    %v762 = vrot.slane %v191, %v761
    %v763 = vmul.f32 %v427, %v762
    %v764 = vmul.f32 %v428, %v762
    %v765 = vmul.f32 %v763, %v623
    %v766 = vmul.f32 %v764, %v624
    %v767 = vadd.f32 %v757, %v765
    %v768 = vadd.f32 %v758, %v766
    %v769 = vlaneseq
    %v770 = vshrl.u32 %v769, 7
    %v771 = vsub.s32 5, %v770
    %v772 = vrot.slane %v187, %v771
    %v773 = vmul.f32 %v395, %v772
    %v774 = vmul.f32 %v396, %v772
    %v775 = vmul.f32 %v773, %v623
    %v776 = vmul.f32 %v774, %v624
    %v777 = vlaneseq
    %v778 = vshrl.u32 %v777, 7
    %v779 = vsub.s32 5, %v778
    %v780 = vrot.slane %v191, %v779
    %v781 = vmul.f32 %v449, %v780
    %v782 = vmul.f32 %v450, %v780
    %v783 = vmul.f32 %v781, %v641
    %v784 = vmul.f32 %v782, %v642
    %v785 = vadd.f32 %v775, %v783
    %v786 = vadd.f32 %v776, %v784
    %v787 = vlaneseq
    %v788 = vshrl.u32 %v787, 7
    %v789 = vsub.s32 6, %v788
    %v790 = vrot.slane %v187, %v789
    %v791 = vmul.f32 %v417, %v790
    %v792 = vmul.f32 %v418, %v790
    %v793 = vmul.f32 %v791, %v641
    %v794 = vmul.f32 %v792, %v642
    %v795 = vlaneseq
    %v796 = vshrl.u32 %v795, 7
    %v797 = vsub.s32 6, %v796
    %v798 = vrot.slane %v191, %v797
    %v799 = vmul.f32 %v471, %v798
    %v800 = vmul.f32 %v472, %v798
    %v801 = vmul.f32 %v799, %v659
    %v802 = vmul.f32 %v800, %v660
    %v803 = vadd.f32 %v793, %v801
    %v804 = vadd.f32 %v794, %v802
    %v805 = vlaneseq
    %v806 = vshrl.u32 %v805, 7
    %v807 = vsub.s32 7, %v806
    %v808 = vrot.slane %v187, %v807
    %v809 = vmul.f32 %v439, %v808
    %v810 = vmul.f32 %v440, %v808
    %v811 = vmul.f32 %v809, %v659
    %v812 = vmul.f32 %v810, %v660
    %v813 = vlaneseq
    %v814 = vshrl.u32 %v813, 7
    %v815 = vsub.s32 7, %v814
    %v816 = vrot.slane %v191, %v815
    %v817 = vmul.f32 %v493, %v816
    %v818 = vmul.f32 %v494, %v816
    %v819 = vmul.f32 %v817, %v677
    %v820 = vmul.f32 %v818, %v678
    %v821 = vadd.f32 %v811, %v819
    %v822 = vadd.f32 %v812, %v820
    %v823 = vlaneseq
    %v824 = vshrl.u32 %v823, 7
    %v825 = vsub.s32 0, %v824
    %v826 = vrot.slane %v188, %v825
    %v827 = vmul.f32 %v461, %v826
    %v828 = vmul.f32 %v462, %v826
    %v829 = vmul.f32 %v827, %v677
    %v830 = vmul.f32 %v828, %v678
    %v831 = vlaneseq
    %v832 = vshrl.u32 %v831, 7
    %v833 = vsub.s32 0, %v832
    %v834 = vrot.slane %v192, %v833
    %v835 = vmul.f32 %v515, %v834
    %v836 = vmul.f32 %v516, %v834
    %v837 = vmul.f32 %v835, %v695
    %v838 = vmul.f32 %v836, %v696
    %v839 = vadd.f32 %v829, %v837
    %v840 = vadd.f32 %v830, %v838
    %v841 = vlaneseq
    %v842 = vshrl.u32 %v841, 7
    %v843 = vsub.s32 1, %v842
    %v844 = vrot.slane %v188, %v843
    %v845 = vmul.f32 %v483, %v844
    %v846 = vmul.f32 %v484, %v844
    %v847 = vmul.f32 %v845, %v695
    %v848 = vmul.f32 %v846, %v696
    %v849 = vlaneseq
    %v850 = vshrl.u32 %v849, 7
    %v851 = vsub.s32 1, %v850
    %v852 = vrot.slane %v192, %v851
    %v853 = vmul.f32 %v537, %v852
    %v854 = vmul.f32 %v538, %v852
    %v855 = vmul.f32 %v853, %v713
    %v856 = vmul.f32 %v854, %v714
    %v857 = vadd.f32 %v847, %v855
    %v858 = vadd.f32 %v848, %v856
    %v859 = vlaneseq
    %v860 = vshrl.u32 %v859, 7
    %v861 = vsub.s32 2, %v860
    %v862 = vrot.slane %v188, %v861
    %v863 = vmul.f32 %v505, %v862
    %v864 = vmul.f32 %v506, %v862
    %v865 = vmul.f32 %v863, %v713
    %v866 = vmul.f32 %v864, %v714
    %v867 = vlaneseq
    %v868 = vshrl.u32 %v867, 7
    %v869 = vsub.s32 2, %v868
    %v870 = vrot.slane %v192, %v869
    %v871 = vmul.f32 %v559, %v870
    %v872 = vmul.f32 %v560, %v870
    %v873 = vmul.f32 %v871, %v731
    %v874 = vmul.f32 %v872, %v732
    %v875 = vadd.f32 %v865, %v873
    %v876 = vadd.f32 %v866, %v874
    %v877 = vlaneseq
    %v878 = vshrl.u32 %v877, 7
    %v879 = vsub.s32 0, %v878
    %v880 = vrot.slane %v184, %v879
    %v881 = vmul.f32 %v880, %v749
    %v882 = vmul.f32 %v880, %v750
    %v883 = vlaneseq
    %v884 = vshrl.u32 %v883, 7
    %v885 = vsub.s32 1, %v884
    %v886 = vrot.slane %v184, %v885
    %v887 = vmul.f32 %v886, %v767
    %v888 = vmul.f32 %v886, %v768
    %v889 = vadd.f32 %v881, %v887
    %v890 = vadd.f32 %v882, %v888
    %v891 = vlaneseq
    %v892 = vshrl.u32 %v891, 7
    %v893 = vsub.s32 2, %v892
    %v894 = vrot.slane %v184, %v893
    %v895 = vmul.f32 %v894, %v785
    %v896 = vmul.f32 %v894, %v786
    %v897 = vadd.f32 %v889, %v895
    %v898 = vadd.f32 %v890, %v896
    %v899 = vlaneseq
    %v900 = vshrl.u32 %v899, 7
    %v901 = vsub.s32 3, %v900
    %v902 = vrot.slane %v184, %v901
    %v903 = vmul.f32 %v902, %v803
    %v904 = vmul.f32 %v902, %v804
    %v905 = vadd.f32 %v897, %v903
    %v906 = vadd.f32 %v898, %v904
    %v907 = vlaneseq
    %v908 = vshrl.u32 %v907, 7
    %v909 = vsub.s32 4, %v908
    %v910 = vrot.slane %v184, %v909
    %v911 = vmul.f32 %v910, %v821
    %v912 = vmul.f32 %v910, %v822
    %v913 = vadd.f32 %v905, %v911
    %v914 = vadd.f32 %v906, %v912
    %v915 = vlaneseq
    %v916 = vshrl.u32 %v915, 7
    %v917 = vsub.s32 5, %v916
    %v918 = vrot.slane %v184, %v917
    %v919 = vmul.f32 %v918, %v839
    %v920 = vmul.f32 %v918, %v840
    %v921 = vadd.f32 %v913, %v919
    %v922 = vadd.f32 %v914, %v920
    %v923 = vlaneseq
    %v924 = vshrl.u32 %v923, 7
    %v925 = vsub.s32 6, %v924
    %v926 = vrot.slane %v184, %v925
    %v927 = vmul.f32 %v926, %v857
    %v928 = vmul.f32 %v926, %v858
    %v929 = vadd.f32 %v921, %v927
    %v930 = vadd.f32 %v922, %v928
    %v931 = vlaneseq
    %v932 = vshrl.u32 %v931, 7
    %v933 = vsub.s32 7, %v932
    %v934 = vrot.slane %v184, %v933
    %v935 = vmul.f32 %v934, %v875
    %v936 = vmul.f32 %v934, %v876
    %v937 = vadd.f32 %v929, %v935
    %v938 = vadd.f32 %v930, %v936
    %v939 = vmul.f32 %v174, 0.5
    %v940 = vmul.f32 %v179, 0.5
    %v941 = vtanh.pop %v939
    %v942 = vtanh.pop %v940
    %v943 = vmul.f32 %v941, 0.5
    %v944 = vmul.f32 %v942, 0.5
    %v945 = vadd.f32 %v943, 0.5
    %v946 = vadd.f32 %v944, 0.5
    %v947 = vmul.f32 %v174, %v945
    %v948 = vmul.f32 %v179, %v946
    %v949 = vld [vmem:[%s8] sm:$0x1]
    %v950 = vld [vmem:[%s6] sm:$0x1]
    %v952 = vlaneseq
    %v953 = vshrl.u32 %v952, 7
    %v954 = vsub.s32 0, %v953
    %v955 = vrot.slane %v950, %v954
    %v957 = vmul.f32 %v955, %v947
    %v958 = vmul.f32 %v955, %v948
    %v959 = vld [vmem:[%s7] sm:$0x1]
    %v961 = vlaneseq
    %v962 = vshrl.u32 %v961, 7
    %v963 = vsub.s32 0, %v962
    %v964 = vrot.slane %v959, %v963
    %v966 = vmul.f32 %v964, %v937
    %v967 = vmul.f32 %v964, %v938
    %v968 = vadd.f32 %v957, %v966
    %v969 = vadd.f32 %v958, %v967
    %v971 = vlaneseq
    %v972 = vshrl.u32 %v971, 7
    %v973 = vsub.s32 0, %v972
    %v974 = vrot.slane %v949, %v973
    %v976 = vmul.f32 %v974, %v968
    %v977 = vmul.f32 %v974, %v969
    %978 = vst [vmem:[#allocation10] sm:$0xff] %v937
    %979 = vst [vmem:[#allocation10 + $0x8] sm:$0xff] %v938
    %980 = vst [vmem:[#allocation11] sm:$0xff] %v976
    %981 = vst [vmem:[#allocation11 + $0x8] sm:$0xff] %v977
    %p982 = scmp.eq.s32.totalorder 0, 0
    // Predicated region
    $region58: #{tpu_custom_call.1} parent=1 // pred_check
      %p983 = pneg %p982
    $region59: #{tpu_custom_call.1} parent=1 // pred_check_branch
      %985 = sbr.rel (%p983) target = $region61
    $region60: #{tpu_custom_call.1} parent=1 // pred_region
      %986 = vst [vmem:[#allocation13] sm:$0xff] 0.0
      %987 = vst [vmem:[#allocation13 + $0x8] sm:$0xff] 0.0
    $region61: #{tpu_custom_call.1} parent=1 // pred_fallthru
      _
    %v988 = vld [vmem:[#allocation13] sm:$0xff]
    %v989 = vld [vmem:[#allocation13 + $0x8] sm:$0xff]
    %v990 = vld [vmem:[#allocation8] sm:$0xff]
    %v991 = vld [vmem:[#allocation8 + $0x8] sm:$0xff]
    %v992 = vld [vmem:[#allocation8 + $0x10] sm:$0xff]
    %v993 = vld [vmem:[#allocation8 + $0x18] sm:$0xff]
    %v994 = vld [vmem:[#allocation8 + $0x20] sm:$0xff]
    %v995 = vld [vmem:[#allocation8 + $0x28] sm:$0xff]
    %v996 = vld [vmem:[#allocation8 + $0x30] sm:$0xff]
    %v997 = vld [vmem:[#allocation8 + $0x38] sm:$0xff]
    %v998 = vld [vmem:[#allocation8 + $0x40] sm:$0xff]
    %v999 = vld [vmem:[#allocation8 + $0x48] sm:$0xff]
    %v1000 = vld [vmem:[#allocation8 + $0x50] sm:$0xff]
    %v1001 = vld [vmem:[#allocation8 + $0x58] sm:$0xff]
    %v1002 = vld [vmem:[#allocation8 + $0x60] sm:$0xff]
    %v1003 = vld [vmem:[#allocation8 + $0x68] sm:$0xff]
    %v1004 = vld [vmem:[#allocation8 + $0x70] sm:$0xff]
    %v1005 = vld [vmem:[#allocation8 + $0x78] sm:$0xff]
    %1006 = vmatprep.subr.mxu0 0.0
    %1007 = vmatpush1.msra.mxu0 %v1005
    %1008 = vmatprep.subr.mxu0 0.0
    %1009 = vmatpush1.msra.mxu0 %v1004
    %1010 = vmatprep.subr.mxu0 0.0
    %1011 = vmatpush1.msra.mxu0 %v1003
    %1012 = vmatprep.subr.mxu0 0.0
    %1013 = vmatpush1.msra.mxu0 %v1002
    %1014 = vmatprep.subr.mxu0 0.0
    %1015 = vmatpush1.msra.mxu0 %v1001
    %1016 = vmatprep.subr.mxu0 0.0
    %1017 = vmatpush1.msra.mxu0 %v1000
    %1018 = vmatprep.subr.mxu0 0.0
    %1019 = vmatpush1.msra.mxu0 %v999
    %1020 = vmatprep.subr.mxu0 0.0
    %1021 = vmatpush1.msra.mxu0 %v998
    %1022 = vmatprep.subr.mxu0 0.0
    %1023 = vmatpush1.msra.mxu0 %v997
    %1024 = vmatprep.subr.mxu0 0.0
    %1025 = vmatpush1.msra.mxu0 %v996
    %1026 = vmatprep.subr.mxu0 0.0
    %1027 = vmatpush1.msra.mxu0 %v995
    %1028 = vmatprep.subr.mxu0 0.0
    %1029 = vmatpush1.msra.mxu0 %v994
    %1030 = vmatprep.subr.mxu0 0.0
    %1031 = vmatpush1.msra.mxu0 %v993
    %1032 = vmatprep.subr.mxu0 0.0
    %1033 = vmatpush1.msra.mxu0 %v992
    %1034 = vmatprep.subr.mxu0 0.0
    %1035 = vmatpush1.msra.mxu0 %v991
    %1036 = vmatprep.subr.mxu0 0.0
    %1037 = vmatpush1.msra.mxu0 %v990
    %1038 = vmatprep.subr.mxu0 0.0
    %1039 = vmatpush2.msra.mxu0 0.0
    %1040 = vmatprep.subr.mxu0 0.0
    %1041 = vmatpush2.msra.mxu0 0.0
    %1042 = vmatprep.subr.mxu0 0.0
    %1043 = vmatpush2.msra.mxu0 0.0
    %1044 = vmatprep.subr.mxu0 0.0
    %1045 = vmatpush2.msra.mxu0 0.0
    %1046 = vmatprep.subr.mxu0 0.0
    %1047 = vmatpush2.msra.mxu0 0.0
    %1048 = vmatprep.subr.mxu0 0.0
    %1049 = vmatpush2.msra.mxu0 0.0
    %1050 = vmatprep.subr.mxu0 0.0
    %1051 = vmatpush2.msra.mxu0 0.0
    %1052 = vmatprep.subr.mxu0 0.0
    %1053 = vmatpush2.msra.mxu0 0.0
    %1054 = vmatprep.subr.mxu0 0.0
    %1055 = vmatpush2.msra.mxu0 0.0
    %1056 = vmatprep.subr.mxu0 0.0
    %1057 = vmatpush2.msra.mxu0 0.0
    %1058 = vmatprep.subr.mxu0 0.0
    %1059 = vmatpush2.msra.mxu0 0.0
    %1060 = vmatprep.subr.mxu0 0.0
    %1061 = vmatpush2.msra.mxu0 0.0
    %1062 = vmatprep.subr.mxu0 0.0
    %1063 = vmatpush2.msra.mxu0 0.0
    %1064 = vmatprep.subr.mxu0 0.0
    %1065 = vmatpush2.msra.mxu0 0.0
    %1066 = vmatprep.subr.mxu0 0.0
    %1067 = vmatpush2.msra.mxu0 0.0
    %1068 = vmatprep.subr.mxu0 0.0
    %1069 = vmatpush2.msra.mxu0 0.0
    %1070 = vmatprep.mubr.f32.mxu0 0.0
    %1071 = vmatmul.mubr.f32.gmra.mxu0 %v976
    %v1072 = vpop.f32.mrf.mxu0
    %v1073 = vadd.f32 0.0, %v1072
    %v1074 = vpop.f32.mrf.mxu0
    %1075 = vmatprep.mubr.f32.mxu0 0.0
    %1076 = vmatmul.mubr.f32.gmra.mxu0 %v977
    %v1077 = vpop.f32.mrf.mxu0
    %v1078 = vadd.f32 0.0, %v1077
    %v1079 = vpop.f32.mrf.mxu0
    %1080 = vdwg.mxu0
    %v1081 = vadd.f32 %v988, %v1073
    %v1082 = vadd.f32 %v989, %v1078
    %1083 = vst [vmem:[#allocation13] sm:$0xff] %v1081
    %1084 = vst [vmem:[#allocation13 + $0x8] sm:$0xff] %v1082
    // Predicated region
    $region62: #{tpu_custom_call.1} parent=1 // pred_check
      _
    $region63: #{tpu_custom_call.1} parent=1 // pred_check_branch
      %1086 = sbr.rel (0) target = $region65
    $region64: #{tpu_custom_call.1} parent=1 // pred_region
      %s1088 = ssub.s32 256, 256
      %1089 = vsyncadd [#allocation4], %s1088
      %s1090 = sshll.u32 [#allocation10], 4
      %s1091 = int_to_ptr.vmem [resolvable:$true] %s1090
      %1096 = dma.vmem_to_hbm [thread:$0]  %s1091, 256, %s10, [#allocation4], 128, 128, 8
    $region65: #{tpu_custom_call.1} parent=1 // pred_fallthru
      _
    // Predicated region
    $region66: #{tpu_custom_call.1} parent=1 // pred_check
      _
    $region67: #{tpu_custom_call.1} parent=1 // pred_check_branch
      %1098 = sbr.rel (0) target = $region69
    $region68: #{tpu_custom_call.1} parent=1 // pred_region
      %s1100 = ssub.s32 256, 256
      %1101 = vsyncadd [#allocation12], %s1100
      %s1102 = sshll.u32 [#allocation11], 4
      %s1103 = int_to_ptr.vmem [resolvable:$true] %s1102
      %1108 = dma.vmem_to_hbm [thread:$0]  %s1103, 256, %s11, [#allocation12], 128, 128, 8
    $region69: #{tpu_custom_call.1} parent=1 // pred_fallthru
      _
    // Predicated region
    $region70: #{tpu_custom_call.1} parent=1 // pred_check
      _
    $region71: #{tpu_custom_call.1} parent=1 // pred_check_branch
      %1110 = sbr.rel (0) target = $region73
    $region72: #{tpu_custom_call.1} parent=1 // pred_region
      %s1112 = ssub.s32 256, 256
      %1113 = vsyncadd [#allocation12], %s1112
      %s1114 = sshll.u32 [#allocation13], 4
      %s1115 = int_to_ptr.vmem [resolvable:$true] %s1114
      %1120 = dma.vmem_to_hbm [thread:$0]  %s1115, 256, %s12, [#allocation12], 128, 128, 8
    $region73: #{tpu_custom_call.1} parent=1 // pred_fallthru
      _
    // Predicated region
    $region74: #{tpu_custom_call.1} parent=1 // pred_check
      _
    $region75: #{tpu_custom_call.1} parent=1 // pred_check_branch
      %1122 = sbr.rel (0) target = $region77
    $region76: #{tpu_custom_call.1} parent=1 // pred_region
      %1123 = dma.done [#allocation4], 256
    $region77: #{tpu_custom_call.1} parent=1 // pred_fallthru
      _
    // Predicated region
    $region78: #{tpu_custom_call.1} parent=1 // pred_check
      _
    $region79: #{tpu_custom_call.1} parent=1 // pred_check_branch
      %1125 = sbr.rel (0) target = $region81
    $region80: #{tpu_custom_call.1} parent=1 // pred_region
      %1126 = dma.done [#allocation12], 256
    $region81: #{tpu_custom_call.1} parent=1 // pred_fallthru
      _
    // Predicated region
    $region82: #{tpu_custom_call.1} parent=1 // pred_check
      _
    $region83: #{tpu_custom_call.1} parent=1 // pred_check_branch
      %1128 = sbr.rel (0) target = $region85
    $region84: #{tpu_custom_call.1} parent=1 // pred_region
      %1129 = dma.done [#allocation12], 256
    $region85: #{tpu_custom_call.1} parent=1 // pred_fallthru
      _
    %1130 = vsyncpa [#allocation3], 1
    %1131 = vsyncpa [#allocation6], 1
    %1132 = vsyncpa [#allocation9], 1
    %1133 = vsyncpa [#allocation4], 1
    %1134 = vsyncpa [#allocation12], 1

</llo_original>
